<compile_context>
chip_gen: v6e
topology: v6e:2x2x1
jax: 0.10.0
libtpu: 0.0.40
codegen_flags: <defaults>
</compile_context>

<pallas_src>
import jax
import jax.numpy as jnp
from jax import lax
from jax.experimental import pallas as pl
from jax.experimental.pallas import tpu as pltpu


def _round_up(x, m):
    return (x + m - 1) // m * m


def xsscnn_kernel(x_ref, w1_ref, b1_ref, w2_ref, b2_ref, wc_ref, bc_ref, o_ref):
    """One batch block. Three matmuls, two lane-half maxpools, softmax.

    x_ref : (TB, L*C)        compute dtype (f32 or bf16)
    w1_ref: (L*C, 2*H1)      block-banded conv1 weights (pool pairs split halves)
    w2_ref: (H1, 2*H2)       block-banded conv2 weights
    wc_ref: (H2, 128)        fused dense1@dense2 weights (cols 2.. are zero)
    biases: f32, (1, N)
    o_ref : (TB, 128)        softmax probabilities (lanes 2.. are exactly 0)
    """
    cdt = w1_ref.dtype

    x = x_ref[...]                                                    # (TB, L*C)

    # conv1 + bias + ReLU : one MXU matmul, f32 accumulation
    h1 = jnp.dot(x, w1_ref[...], preferred_element_type=jnp.float32)
    h1 = jnp.maximum(h1 + b1_ref[...], 0.0)                           # (TB, 2*H1)
    H1 = h1.shape[1] // 2
    # maxpool1: even conv positions live in lanes [0:H1), odd in [H1:2*H1)
    p1 = jnp.maximum(h1[:, :H1], h1[:, H1:])                          # (TB, H1)

    # conv2 + bias + ReLU
    h2 = jnp.dot(p1.astype(cdt), w2_ref[...], preferred_element_type=jnp.float32)
    h2 = jnp.maximum(h2 + b2_ref[...], 0.0)                           # (TB, 2*H2)
    H2 = h2.shape[1] // 2
    # maxpool2
    p2 = jnp.maximum(h2[:, :H2], h2[:, H2:])                          # (TB, H2=128)

    # fused dense1 + dense2 (+ flatten permutation folded into wc)
    y = jnp.dot(p2.astype(cdt), wc_ref[...], preferred_element_type=jnp.float32)
    y = y + bc_ref[...]                                               # (TB, 128)

    # softmax over the 128 lanes; pad lanes carry a -1e30 bias -> exp == 0
    m = jnp.max(y, axis=1, keepdims=True)
    e = jnp.exp(y - m)
    s = jnp.sum(e, axis=1, keepdims=True)
    o_ref[...] = e * pl.reciprocal(s, approx=False)


def xsscnn_forward(x_ncw, params, *, compute_dtype=jnp.float32, batch_block=512):
    """x_ncw: (B, embedding_size, text_length) float32, PyTorch NCW convention.

    compute_dtype: dtype of the matmul inputs (jnp.float32 or jnp.bfloat16);
                   accumulation is always float32.
    batch_block:   target examples per grid step for large batches.
    """
    (w1, b1, w2, b2, wd1, bd1, wd2, bd2) = params
    B, C, L = x_ncw.shape
    L1 = L - 2
    P1 = L1 // 2                       # length after maxpool1
    L2 = P1 - 2
    P2 = L2 // 2                       # == final_length of the PyTorch module
    H1 = _round_up(P1 * 64, 128)       # per-half lane width after conv1
    H2 = _round_up(P2 * 32, 128)       # per-half lane width after conv2 (=128 here)
    NIN = L * C
    NOUT = 128
    F = 32 * P2
    f32 = jnp.float32

    # ---- parameter prep (plain-JAX glue; in production precompute once) -------
    # conv1 as block-banded matrix: column m*H1 + p*64 + o <-> conv1 output
    # channel o at position u = 2*p + m (pool pair members go to opposite halves).
    w1_t = jnp.transpose(w1, (2, 1, 0)).astype(f32)                   # (3, C, 64)
    t_in = jnp.arange(L)
    u_out = jnp.arange(2 * P1)
    A1 = jnp.zeros((L, C, 2 * P1, 64), f32)
    for k in range(3):
        sel = (t_in[:, None] == u_out[None, :] + k).astype(f32)       # (L, 2P1)
        A1 = A1 + sel[:, None, :, None] * w1_t[k][None, :, None, :]
    A1 = A1.reshape(NIN, P1, 2, 64)
    W1 = jnp.zeros((NIN, 2 * H1), f32)
    W1 = W1.at[:, 0:P1 * 64].set(A1[:, :, 0, :].reshape(NIN, P1 * 64))
    W1 = W1.at[:, H1:H1 + P1 * 64].set(A1[:, :, 1, :].reshape(NIN, P1 * 64))
    b1_tile = jnp.tile(b1.astype(f32), P1)
    b1f = jnp.zeros((1, 2 * H1), f32)
    b1f = b1f.at[0, 0:P1 * 64].set(b1_tile).at[0, H1:H1 + P1 * 64].set(b1_tile)

    # conv2 as block-banded matrix: row p*64 + c2 <-> pool1 position p, channel c2.
    w2_t = jnp.transpose(w2, (2, 1, 0)).astype(f32)                   # (3, 64, 32)
    p_in = jnp.arange(P1)
    t_out = jnp.arange(2 * P2)
    A2 = jnp.zeros((P1, 64, 2 * P2, 32), f32)
    for k in range(3):
        sel = (p_in[:, None] == t_out[None, :] + k).astype(f32)       # (P1, 2P2)
        A2 = A2 + sel[:, None, :, None] * w2_t[k][None, :, None, :]
    A2 = A2.reshape(P1 * 64, P2, 2, 32)
    W2 = jnp.zeros((H1, 2 * H2), f32)
    W2 = W2.at[0:P1 * 64, 0:P2 * 32].set(A2[:, :, 0, :].reshape(P1 * 64, P2 * 32))
    W2 = W2.at[0:P1 * 64, H2:H2 + P2 * 32].set(A2[:, :, 1, :].reshape(P1 * 64, P2 * 32))
    b2_tile = jnp.tile(b2.astype(f32), P2)
    b2f = jnp.zeros((1, 2 * H2), f32)
    b2f = b2f.at[0, 0:P2 * 32].set(b2_tile).at[0, H2:H2 + P2 * 32].set(b2_tile)

    # dense1 and dense2 fused (no nonlinearity between them; dropout is identity).
    # Kernel flatten order is position-major (q*32 + o2); torch.flatten on the
    # NCW tensor is channel-major (o2*P2 + q) -> permute the fused weight rows.
    Wc_t = wd1.astype(f32).T @ wd2.astype(f32).T                      # (F, 2)
    bc = bd1.astype(f32) @ wd2.astype(f32).T + bd2.astype(f32)        # (2,)
    Wc_perm = Wc_t.reshape(32, P2, 2).transpose(1, 0, 2).reshape(F, 2)
    Wc = jnp.zeros((H2, NOUT), f32).at[:F, :2].set(Wc_perm)
    # pad lanes get a huge negative bias so their softmax contribution is exactly 0
    bcf = jnp.full((1, NOUT), -1e30, f32).at[0, :2].set(bc)

    W1c = W1.astype(compute_dtype)
    W2c = W2.astype(compute_dtype)
    Wcc = Wc.astype(compute_dtype)

    # ---- lane-dense input: (B, L*C), cast at the boundary ----------------------
    x2 = jnp.transpose(x_ncw, (0, 2, 1)).reshape(B, NIN).astype(compute_dtype)

    # ---- batch blocking: even grid-step count for balanced 2-TC split on v7x ---
    if B <= batch_block:
        steps, TB = 1, B
    else:
        steps = pl.cdiv(B, batch_block)
        if steps % 2:
            steps += 1
        TB = _round_up(pl.cdiv(B, steps), 8)
    Bp = steps * TB
    if Bp != B:
        x2 = jnp.pad(x2, ((0, Bp - B), (0, 0)))

    out = pl.pallas_call(
        xsscnn_kernel,
        out_shape=jax.ShapeDtypeStruct((Bp, NOUT), jnp.float32),
        grid=(steps,),
        in_specs=[
            pl.BlockSpec((TB, NIN), lambda b: (b, 0)),
            # Weights / biases: constant block index -> VMEM-resident across steps.
            pl.BlockSpec((NIN, 2 * H1), lambda b: (0, 0)),
            pl.BlockSpec((1, 2 * H1), lambda b: (0, 0)),
            pl.BlockSpec((H1, 2 * H2), lambda b: (0, 0)),
            pl.BlockSpec((1, 2 * H2), lambda b: (0, 0)),
            pl.BlockSpec((H2, NOUT), lambda b: (0, 0)),
            pl.BlockSpec((1, NOUT), lambda b: (0, 0)),
        ],
        out_specs=pl.BlockSpec((TB, NOUT), lambda b: (b, 0)),
        compiler_params=pltpu.CompilerParams(
            dimension_semantics=("parallel",),
            vmem_limit_bytes=32 * 1024 * 1024),
    )(x2, W1c, b1f, W2c, b2f, Wcc, bcf)

    return out[:B, :2]


def reference_forward(x_ncw, params):
    """Independent pure-JAX reference mirroring the PyTorch forward exactly."""
    (w1, b1, w2, b2, wd1, bd1, wd2, bd2) = params
    dn = ("NCH", "OIH", "NCH")
    h = lax.conv_general_dilated(x_ncw, w1, window_strides=(1,),
                                 padding="VALID", dimension_numbers=dn)
    h = jnp.maximum(h + b1[None, :, None], 0.0)
    P1 = h.shape[-1] // 2
    h = h[:, :, :2 * P1].reshape(h.shape[0], h.shape[1], P1, 2).max(axis=-1)
    h = lax.conv_general_dilated(h, w2, window_strides=(1,),
                                 padding="VALID", dimension_numbers=dn)
    h = jnp.maximum(h + b2[None, :, None], 0.0)
    P2 = h.shape[-1] // 2
    h = h[:, :, :2 * P2].reshape(h.shape[0], h.shape[1], P2, 2).max(axis=-1)
    flat = h.reshape(h.shape[0], -1)                  # torch.flatten(start_dim=1)
    y = flat @ wd1.T + bd1
    y = y @ wd2.T + bd2
    return jax.nn.softmax(y, axis=1)


def init_params(key, text_length, embedding_size):
    final_length = int((int((text_length - 2) / 2) - 2) / 2)
    ks = jax.random.split(key, 8)
    scale = 0.1
    w1 = scale * jax.random.normal(ks[0], (64, embedding_size, 3), jnp.float32)
    b1 = scale * jax.random.normal(ks[1], (64,), jnp.float32)
    w2 = scale * jax.random.normal(ks[2], (32, 64, 3), jnp.float32)
    b2 = scale * jax.random.normal(ks[3], (32,), jnp.float32)
    wd1 = scale * jax.random.normal(ks[4], (100, 32 * final_length), jnp.float32)
    bd1 = scale * jax.random.normal(ks[5], (100,), jnp.float32)
    wd2 = scale * jax.random.normal(ks[6], (2, 100), jnp.float32)
    bd2 = scale * jax.random.normal(ks[7], (2,), jnp.float32)
    return (w1, b1, w2, b2, wd1, bd1, wd2, bd2)


if __name__ == "__main__":
    TEXT_LENGTH = 20
    EMBEDDING_SIZE = 8

    key = jax.random.PRNGKey(0)
    k_x, k_x2, k_p = jax.random.split(key, 3)
    params = init_params(k_p, TEXT_LENGTH, EMBEDDING_SIZE)

    # Small batch: whole batch in a single grid step.
    x_small = jax.random.normal(k_x, (2, EMBEDDING_SIZE, TEXT_LENGTH), jnp.float32)
    out = jax.block_until_ready(xsscnn_forward(x_small, params))
    ref = jax.block_until_ready(reference_forward(x_small, params))
    assert out.shape == (2, 2)
    assert jnp.allclose(out, ref, atol=1e-4, rtol=1e-4), (out, ref)

    # Larger batch: exercises the multi-step (even) grid + batch padding.
    x_big = jax.random.normal(k_x2, (300, EMBEDDING_SIZE, TEXT_LENGTH), jnp.float32)
    out_big = jax.block_until_ready(xsscnn_forward(x_big, params, batch_block=128))
    ref_big = jax.block_until_ready(reference_forward(x_big, params))
    assert out_big.shape == (300, 2)
    assert jnp.allclose(out_big, ref_big, atol=1e-4, rtol=1e-4)

    # bf16 MXU-input path (cast at the wrapper boundary); f32 accumulation.
    out_bf16 = jax.block_until_ready(
        xsscnn_forward(x_big, params, compute_dtype=jnp.bfloat16, batch_block=128))
    assert jnp.allclose(out_bf16, ref_big, atol=3e-2, rtol=3e-2)

    print("KERNEL_OK")
</pallas_src>

<mosaic_0001>
module attributes {stable_mosaic.version = 11 : i64} {
  func.func @xsscnn_kernel(%arg0: i32, %arg1: memref<2x160xf32, #tpu.memory_space<vmem>>, %arg2: memref<160x1280xf32, #tpu.memory_space<vmem>>, %arg3: memref<1x1280xf32, #tpu.memory_space<vmem>>, %arg4: memref<640x256xf32, #tpu.memory_space<vmem>>, %arg5: memref<1x256xf32, #tpu.memory_space<vmem>>, %arg6: memref<128x128xf32, #tpu.memory_space<vmem>>, %arg7: memref<1x128xf32, #tpu.memory_space<vmem>>, %arg8: memref<2x128xf32, #tpu.memory_space<vmem>>) attributes {dimension_semantics = [#tpu.dimension_semantics<parallel>], iteration_bounds = array<i64: 1>, scalar_prefetch = 0 : i64, scratch_operands = 0 : i64, tpu.core_type = #tpu.core_type<tc>, window_params = [{transform_indices = @transform_0, window_bounds = array<i64: 2, 160>}, {pipeline_mode = #tpu.pipeline_mode<synchronous>, transform_indices = @transform_1, window_bounds = array<i64: 160, 1280>}, {pipeline_mode = #tpu.pipeline_mode<synchronous>, transform_indices = @transform_2, window_bounds = array<i64: 1, 1280>}, {pipeline_mode = #tpu.pipeline_mode<synchronous>, transform_indices = @transform_3, window_bounds = array<i64: 640, 256>}, {pipeline_mode = #tpu.pipeline_mode<synchronous>, transform_indices = @transform_4, window_bounds = array<i64: 1, 256>}, {pipeline_mode = #tpu.pipeline_mode<synchronous>, transform_indices = @transform_5, window_bounds = array<i64: 128, 128>}, {pipeline_mode = #tpu.pipeline_mode<synchronous>, transform_indices = @transform_6, window_bounds = array<i64: 1, 128>}, {transform_indices = @transform_7, window_bounds = array<i64: 2, 128>}]} {
    %c0 = arith.constant 0 : index
    %c0_0 = arith.constant 0 : index
    %0 = vector.load %arg1[%c0, %c0_0] : memref<2x160xf32, #tpu.memory_space<vmem>>, vector<2x160xf32>
    %c0_1 = arith.constant 0 : index
    %c0_2 = arith.constant 0 : index
    %1 = vector.load %arg2[%c0_1, %c0_2] : memref<160x1280xf32, #tpu.memory_space<vmem>>, vector<160x1280xf32>
    %cst = arith.constant dense<0.000000e+00> : vector<2x1280xf32>
    %2 = tpu.matmul %0, %1, %cst {dimension_numbers = #tpu.dot_dimension_numbers<[1], [0], [0], [1], [0, 0, 1, 1], [], []>} : vector<2x160xf32>, vector<160x1280xf32>, vector<2x1280xf32> -> vector<2x1280xf32>
    %c0_3 = arith.constant 0 : index
    %c0_4 = arith.constant 0 : index
    %3 = vector.load %arg3[%c0_3, %c0_4] : memref<1x1280xf32, #tpu.memory_space<vmem>>, vector<1x1280xf32>
    %4 = vector.broadcast %3 : vector<1x1280xf32> to vector<2x1280xf32>
    %5 = arith.addf %2, %4 : vector<2x1280xf32>
    %cst_5 = arith.constant 0.000000e+00 : f32
    %6 = vector.broadcast %cst_5 : f32 to vector<2x1280xf32>
    %7 = arith.maximumf %5, %6 : vector<2x1280xf32>
    %8 = vector.extract_strided_slice %7 {offsets = [0, 0], sizes = [2, 640], strides = [1, 1]} : vector<2x1280xf32> to vector<2x640xf32>
    %9 = vector.extract_strided_slice %7 {offsets = [0, 640], sizes = [2, 640], strides = [1, 1]} : vector<2x1280xf32> to vector<2x640xf32>
    %10 = arith.maximumf %8, %9 : vector<2x640xf32>
    %c0_6 = arith.constant 0 : index
    %c0_7 = arith.constant 0 : index
    %11 = vector.load %arg4[%c0_6, %c0_7] : memref<640x256xf32, #tpu.memory_space<vmem>>, vector<640x256xf32>
    %cst_8 = arith.constant dense<0.000000e+00> : vector<2x256xf32>
    %12 = tpu.matmul %10, %11, %cst_8 {dimension_numbers = #tpu.dot_dimension_numbers<[1], [0], [0], [1], [0, 0, 1, 1], [], []>} : vector<2x640xf32>, vector<640x256xf32>, vector<2x256xf32> -> vector<2x256xf32>
    %c0_9 = arith.constant 0 : index
    %c0_10 = arith.constant 0 : index
    %13 = vector.load %arg5[%c0_9, %c0_10] : memref<1x256xf32, #tpu.memory_space<vmem>>, vector<1x256xf32>
    %14 = vector.broadcast %13 : vector<1x256xf32> to vector<2x256xf32>
    %15 = arith.addf %12, %14 : vector<2x256xf32>
    %cst_11 = arith.constant 0.000000e+00 : f32
    %16 = vector.broadcast %cst_11 : f32 to vector<2x256xf32>
    %17 = arith.maximumf %15, %16 : vector<2x256xf32>
    %18 = vector.extract_strided_slice %17 {offsets = [0, 0], sizes = [2, 128], strides = [1, 1]} : vector<2x256xf32> to vector<2x128xf32>
    %19 = vector.extract_strided_slice %17 {offsets = [0, 128], sizes = [2, 128], strides = [1, 1]} : vector<2x256xf32> to vector<2x128xf32>
    %20 = arith.maximumf %18, %19 : vector<2x128xf32>
    %c0_12 = arith.constant 0 : index
    %c0_13 = arith.constant 0 : index
    %21 = vector.load %arg6[%c0_12, %c0_13] : memref<128x128xf32, #tpu.memory_space<vmem>>, vector<128x128xf32>
    %cst_14 = arith.constant dense<0.000000e+00> : vector<2x128xf32>
    %22 = tpu.matmul %20, %21, %cst_14 {dimension_numbers = #tpu.dot_dimension_numbers<[1], [0], [0], [1], [0, 0, 1, 1], [], []>} : vector<2x128xf32>, vector<128x128xf32>, vector<2x128xf32> -> vector<2x128xf32>
    %c0_15 = arith.constant 0 : index
    %c0_16 = arith.constant 0 : index
    %23 = vector.load %arg7[%c0_15, %c0_16] : memref<1x128xf32, #tpu.memory_space<vmem>>, vector<1x128xf32>
    %24 = vector.broadcast %23 : vector<1x128xf32> to vector<2x128xf32>
    %25 = arith.addf %22, %24 : vector<2x128xf32>
    %cst_17 = arith.constant dense<0xFF800000> : vector<2xf32>
    %26 = vector.multi_reduction <maximumf>, %25, %cst_17 [1] : vector<2x128xf32> to vector<2xf32>
    %27 = vector.shape_cast %26 : vector<2xf32> to vector<2x1xf32>
    %28 = vector.broadcast %27 : vector<2x1xf32> to vector<2x128xf32>
    %29 = arith.subf %25, %28 : vector<2x128xf32>
    %30 = math.exp %29 : vector<2x128xf32>
    %cst_18 = arith.constant dense<0.000000e+00> : vector<2xf32>
    %31 = vector.multi_reduction <add>, %30, %cst_18 [1] : vector<2x128xf32> to vector<2xf32>
    %32 = vector.shape_cast %31 : vector<2xf32> to vector<2x1xf32>
    %33 = tpu.reciprocal %32 : vector<2x1xf32> -> vector<2x1xf32>
    %34 = vector.broadcast %33 : vector<2x1xf32> to vector<2x128xf32>
    %35 = arith.mulf %30, %34 : vector<2x128xf32>
    %c0_19 = arith.constant 0 : index
    %c0_20 = arith.constant 0 : index
    %36 = vector.load %arg8[%c0_19, %c0_20] : memref<2x128xf32, #tpu.memory_space<vmem>>, vector<2x128xf32>
    tpu.vector_store %arg8[%c0_19, %c0_20], %35 {strides = array<i32>} : memref<2x128xf32, #tpu.memory_space<vmem>>, vector<2x128xf32>,
    return
  }
  func.func @transform_0(%arg0: i32) -> (i32, i32) {
    %c0_i32 = arith.constant 0 : i32
    %c0_i32_0 = arith.constant 0 : i32
    return %arg0, %c0_i32 : i32, i32
  }
  func.func @transform_1(%arg0: i32) -> (i32, i32) {
    %c0_i32 = arith.constant 0 : i32
    %c0_i32_0 = arith.constant 0 : i32
    %c0_i32_1 = arith.constant 0 : i32
    return %c0_i32, %c0_i32_0 : i32, i32
  }
  func.func @transform_2(%arg0: i32) -> (i32, i32) {
    %c0_i32 = arith.constant 0 : i32
    %c0_i32_0 = arith.constant 0 : i32
    %c0_i32_1 = arith.constant 0 : i32
    return %c0_i32, %c0_i32_0 : i32, i32
  }
  func.func @transform_3(%arg0: i32) -> (i32, i32) {
    %c0_i32 = arith.constant 0 : i32
    %c0_i32_0 = arith.constant 0 : i32
    %c0_i32_1 = arith.constant 0 : i32
    return %c0_i32, %c0_i32_0 : i32, i32
  }
  func.func @transform_4(%arg0: i32) -> (i32, i32) {
    %c0_i32 = arith.constant 0 : i32
    %c0_i32_0 = arith.constant 0 : i32
    %c0_i32_1 = arith.constant 0 : i32
    return %c0_i32, %c0_i32_0 : i32, i32
  }
  func.func @transform_5(%arg0: i32) -> (i32, i32) {
    %c0_i32 = arith.constant 0 : i32
    %c0_i32_0 = arith.constant 0 : i32
    %c0_i32_1 = arith.constant 0 : i32
    return %c0_i32, %c0_i32_0 : i32, i32
  }
  func.func @transform_6(%arg0: i32) -> (i32, i32) {
    %c0_i32 = arith.constant 0 : i32
    %c0_i32_0 = arith.constant 0 : i32
    %c0_i32_1 = arith.constant 0 : i32
    return %c0_i32, %c0_i32_0 : i32, i32
  }
  func.func @transform_7(%arg0: i32) -> (i32, i32) {
    %c0_i32 = arith.constant 0 : i32
    %c0_i32_0 = arith.constant 0 : i32
    return %arg0, %c0_i32 : i32, i32
  }
}

</mosaic_0001>

<llo_original>
// kernel: tpu_custom_call.1
$region0: #{tpu_custom_call.1}
  #allocation0 [shape = 'u32[]', space=smem, size = 0x4, offset = 0x4, fixed_abs, tag = 'smem constant byte address 0x4 - core index']
  #allocation1 [shape = 'u32[144,128]{1,0:T(1,128)}', space=vmem, size = 0x12000, scoped, tag = 'internal scratch']
  %s0 = inlined_call_operand.hbm [shape: f32[2,160], index: 0, kind: input, shape index: {}]
  %s1 = inlined_call_operand.hbm [shape: f32[160,1280], index: 1, kind: input, shape index: {}]
  %s2 = inlined_call_operand.hbm [shape: f32[1,1280], index: 2, kind: input, shape index: {}]
  %s3 = inlined_call_operand.hbm [shape: f32[640,256], index: 3, kind: input, shape index: {}]
  %s4 = inlined_call_operand.vmem [shape: f32[1,256], index: 4, kind: input, shape index: {}]
  %s5 = inlined_call_operand.hbm [shape: f32[128,128], index: 5, kind: input, shape index: {}]
  %s6 = inlined_call_operand.vmem [shape: f32[1,128], index: 6, kind: input, shape index: {}]
  %s7 = inlined_call_operand.hbm [shape: f32[2,128], index: 7, kind: output, shape index: {}]
  %s8 = sld [smem:[#allocation0]]
  $region58: #{tpu_custom_call.1} parent=0
    _
  %s10 = ssub.s32 1, %s8
  %s11 = scalar_select 0, %s10, %s8
  $region1: #{tpu_custom_call.1} parent=0
    #allocation2 [shape = 'u8[2048]{0}', space=vmem, size = 0x800, scoped, tag = 'input window, operand 0, single buffered']
    #allocation3 [shape = 's32[1]{0}', space=sflag, size = 0x4, scoped, tag = 'scoped memory for tpu_custom_call.1']
    #allocation4 [shape = 's32[1]{0}', space=sflag, size = 0x4, scoped, tag = 'scoped memory for tpu_custom_call.1']
    #allocation5 [shape = 'u8[819200]{0}', space=vmem, size = 0xc8000, scoped, tag = 'input window, operand 1, single buffered']
    #allocation6 [shape = 's32[1]{0}', space=sflag, size = 0x4, scoped, tag = 'scoped memory for tpu_custom_call.1']
    #allocation7 [shape = 'u8[5120]{0}', space=vmem, size = 0x1400, scoped, tag = 'input window, operand 2, single buffered']
    #allocation8 [shape = 'u8[655360]{0}', space=vmem, size = 0xa0000, scoped, tag = 'input window, operand 3, single buffered']
    #allocation9 [shape = 's32[1]{0}', space=sflag, size = 0x4, scoped, tag = 'scoped memory for tpu_custom_call.1']
    #allocation10 [shape = 'u8[65536]{0}', space=vmem, size = 0x10000, scoped, tag = 'input window, operand 5, single buffered']
    #allocation11 [shape = 'u8[1024]{0}', space=vmem, size = 0x400, scoped, tag = 'output window, operand 0, single buffered']
    %12 = vsyncpa [#allocation3], 0
    %13 = vsyncpa [#allocation6], 0
    %14 = vsyncpa [#allocation9], 0
    %15 = vsyncpa [#allocation4], 0
    // Predicated region
    $region2: #{tpu_custom_call.1} parent=1 // pred_check
      _
    $region3: #{tpu_custom_call.1} parent=1 // pred_check_branch
      %17 = sbr.rel (0) target = $region5
    $region4: #{tpu_custom_call.1} parent=1 // pred_region
      %s19 = ssub.s32 64, 64
      %20 = vsyncadd [#allocation3], %s19
      %s22 = sshll.u32 [#allocation2], 4
      %s23 = int_to_ptr.vmem [resolvable:$true] %s22
      %25 = dma.hbm_to_vmem [thread:$0]  %s0, 64, %s23, [#allocation3]
    $region5: #{tpu_custom_call.1} parent=1 // pred_fallthru
      _
    // Predicated region
    $region6: #{tpu_custom_call.1} parent=1 // pred_check
      _
    $region7: #{tpu_custom_call.1} parent=1 // pred_check_branch
      %27 = sbr.rel (0) target = $region9
    $region8: #{tpu_custom_call.1} parent=1 // pred_region
      %s29 = ssub.s32 25600, 25600
      %30 = vsyncadd [#allocation6], %s29
      %s31 = sshll.u32 [#allocation5], 4
      %s32 = int_to_ptr.vmem [resolvable:$true] %s31
      %37 = dma.hbm_to_vmem [thread:$0]  %s1, 25600, %s32, [#allocation6], 1280, 1280, 80
    $region9: #{tpu_custom_call.1} parent=1 // pred_fallthru
      _
    // Predicated region
    $region10: #{tpu_custom_call.1} parent=1 // pred_check
      _
    $region11: #{tpu_custom_call.1} parent=1 // pred_check_branch
      %39 = sbr.rel (0) target = $region13
    $region12: #{tpu_custom_call.1} parent=1 // pred_region
      %s41 = ssub.s32 160, 160
      %42 = vsyncadd [#allocation6], %s41
      %s44 = sshll.u32 [#allocation7], 4
      %s45 = int_to_ptr.vmem [resolvable:$true] %s44
      %47 = dma.hbm_to_vmem [thread:$0]  %s2, 160, %s45, [#allocation6]
    $region13: #{tpu_custom_call.1} parent=1 // pred_fallthru
      _
    // Predicated region
    $region14: #{tpu_custom_call.1} parent=1 // pred_check
      _
    $region15: #{tpu_custom_call.1} parent=1 // pred_check_branch
      %49 = sbr.rel (0) target = $region17
    $region16: #{tpu_custom_call.1} parent=1 // pred_region
      %s51 = ssub.s32 20480, 20480
      %52 = vsyncadd [#allocation9], %s51
      %s53 = sshll.u32 [#allocation8], 4
      %s54 = int_to_ptr.vmem [resolvable:$true] %s53
      %59 = dma.hbm_to_vmem [thread:$0]  %s3, 20480, %s54, [#allocation9], 256, 256, 16
    $region17: #{tpu_custom_call.1} parent=1 // pred_fallthru
      _
    // Predicated region
    $region18: #{tpu_custom_call.1} parent=1 // pred_check
      _
    $region19: #{tpu_custom_call.1} parent=1 // pred_check_branch
      %61 = sbr.rel (0) target = $region21
    $region20: #{tpu_custom_call.1} parent=1 // pred_region
      _
    $region21: #{tpu_custom_call.1} parent=1 // pred_fallthru
      _
    // Predicated region
    $region22: #{tpu_custom_call.1} parent=1 // pred_check
      _
    $region23: #{tpu_custom_call.1} parent=1 // pred_check_branch
      %63 = sbr.rel (0) target = $region25
    $region24: #{tpu_custom_call.1} parent=1 // pred_region
      %s65 = ssub.s32 2048, 2048
      %66 = vsyncadd [#allocation9], %s65
      %s67 = sshll.u32 [#allocation10], 4
      %s68 = int_to_ptr.vmem [resolvable:$true] %s67
      %73 = dma.hbm_to_vmem [thread:$0]  %s5, 2048, %s68, [#allocation9], 128, 128, 8
    $region25: #{tpu_custom_call.1} parent=1 // pred_fallthru
      _
    // Predicated region
    $region26: #{tpu_custom_call.1} parent=1 // pred_check
      _
    $region27: #{tpu_custom_call.1} parent=1 // pred_check_branch
      %75 = sbr.rel (0) target = $region29
    $region28: #{tpu_custom_call.1} parent=1 // pred_region
      _
    $region29: #{tpu_custom_call.1} parent=1 // pred_fallthru
      _
    // Predicated region
    $region30: #{tpu_custom_call.1} parent=1 // pred_check
      _
    $region31: #{tpu_custom_call.1} parent=1 // pred_check_branch
      %77 = sbr.rel (0) target = $region33
    $region32: #{tpu_custom_call.1} parent=1 // pred_region
      %78 = dma.done [#allocation3], 64
    $region33: #{tpu_custom_call.1} parent=1 // pred_fallthru
      _
    // Predicated region
    $region34: #{tpu_custom_call.1} parent=1 // pred_check
      _
    $region35: #{tpu_custom_call.1} parent=1 // pred_check_branch
      %80 = sbr.rel (0) target = $region37
    $region36: #{tpu_custom_call.1} parent=1 // pred_region
      %81 = dma.done [#allocation6], 25600
    $region37: #{tpu_custom_call.1} parent=1 // pred_fallthru
      _
    // Predicated region
    $region38: #{tpu_custom_call.1} parent=1 // pred_check
      _
    $region39: #{tpu_custom_call.1} parent=1 // pred_check_branch
      %83 = sbr.rel (0) target = $region41
    $region40: #{tpu_custom_call.1} parent=1 // pred_region
      %84 = dma.done [#allocation6], 160
    $region41: #{tpu_custom_call.1} parent=1 // pred_fallthru
      _
    // Predicated region
    $region42: #{tpu_custom_call.1} parent=1 // pred_check
      _
    $region43: #{tpu_custom_call.1} parent=1 // pred_check_branch
      %86 = sbr.rel (0) target = $region45
    $region44: #{tpu_custom_call.1} parent=1 // pred_region
      %87 = dma.done [#allocation9], 20480
    $region45: #{tpu_custom_call.1} parent=1 // pred_fallthru
      _
    // Predicated region
    $region46: #{tpu_custom_call.1} parent=1 // pred_check
      _
    $region47: #{tpu_custom_call.1} parent=1 // pred_check_branch
      %89 = sbr.rel (0) target = $region49
    $region48: #{tpu_custom_call.1} parent=1 // pred_region
      %90 = dma.done [#allocation9], 2048
    $region49: #{tpu_custom_call.1} parent=1 // pred_fallthru
      _
    %v91 = vld [vmem:[#allocation2] sm:$0xf]
    %v92 = vld [vmem:[#allocation5] sm:$0xff]
    %v93 = vld [vmem:[#allocation5 + $0x8] sm:$0xff]
    %v94 = vld [vmem:[#allocation5 + $0x10] sm:$0xff]
    %v95 = vld [vmem:[#allocation5 + $0x18] sm:$0xff]
    %v96 = vld [vmem:[#allocation5 + $0x20] sm:$0xff]
    %v97 = vld [vmem:[#allocation5 + $0x28] sm:$0xff]
    %v98 = vld [vmem:[#allocation5 + $0x30] sm:$0xff]
    %v99 = vld [vmem:[#allocation5 + $0x38] sm:$0xff]
    %v100 = vld [vmem:[#allocation5 + $0x40] sm:$0xff]
    %v101 = vld [vmem:[#allocation5 + $0x48] sm:$0xff]
    %v102 = vld [vmem:[#allocation5 + $0x50] sm:$0xff]
    %v103 = vld [vmem:[#allocation5 + $0x58] sm:$0xff]
    %v104 = vld [vmem:[#allocation5 + $0x60] sm:$0xff]
    %v105 = vld [vmem:[#allocation5 + $0x68] sm:$0xff]
    %v106 = vld [vmem:[#allocation5 + $0x70] sm:$0xff]
    %v107 = vld [vmem:[#allocation5 + $0x78] sm:$0xff]
    %v108 = vld [vmem:[#allocation5 + $0x80] sm:$0xff]
    %v109 = vld [vmem:[#allocation5 + $0x88] sm:$0xff]
    %v110 = vld [vmem:[#allocation5 + $0x90] sm:$0xff]
    %v111 = vld [vmem:[#allocation5 + $0x98] sm:$0xff]
    %v112 = vld [vmem:[#allocation5 + $0xa0] sm:$0xff]
    %v113 = vld [vmem:[#allocation5 + $0xa8] sm:$0xff]
    %v114 = vld [vmem:[#allocation5 + $0xb0] sm:$0xff]
    %v115 = vld [vmem:[#allocation5 + $0xb8] sm:$0xff]
    %v116 = vld [vmem:[#allocation5 + $0xc0] sm:$0xff]
    %v117 = vld [vmem:[#allocation5 + $0xc8] sm:$0xff]
    %v118 = vld [vmem:[#allocation5 + $0xd0] sm:$0xff]
    %v119 = vld [vmem:[#allocation5 + $0xd8] sm:$0xff]
    %v120 = vld [vmem:[#allocation5 + $0xe0] sm:$0xff]
    %v121 = vld [vmem:[#allocation5 + $0xe8] sm:$0xff]
    %v122 = vld [vmem:[#allocation5 + $0xf0] sm:$0xff]
    %v123 = vld [vmem:[#allocation5 + $0xf8] sm:$0xff]
    %v124 = vld [vmem:[#allocation5 + $0x100] sm:$0xff]
    %v125 = vld [vmem:[#allocation5 + $0x108] sm:$0xff]
    %v126 = vld [vmem:[#allocation5 + $0x110] sm:$0xff]
    %v127 = vld [vmem:[#allocation5 + $0x118] sm:$0xff]
    %v128 = vld [vmem:[#allocation5 + $0x120] sm:$0xff]
    %v129 = vld [vmem:[#allocation5 + $0x128] sm:$0xff]
    %v130 = vld [vmem:[#allocation5 + $0x130] sm:$0xff]
    %v131 = vld [vmem:[#allocation5 + $0x138] sm:$0xff]
    %v132 = vld [vmem:[#allocation5 + $0x140] sm:$0xff]
    %v133 = vld [vmem:[#allocation5 + $0x148] sm:$0xff]
    %v134 = vld [vmem:[#allocation5 + $0x150] sm:$0xff]
    %v135 = vld [vmem:[#allocation5 + $0x158] sm:$0xff]
    %v136 = vld [vmem:[#allocation5 + $0x160] sm:$0xff]
    %v137 = vld [vmem:[#allocation5 + $0x168] sm:$0xff]
    %v138 = vld [vmem:[#allocation5 + $0x170] sm:$0xff]
    %v139 = vld [vmem:[#allocation5 + $0x178] sm:$0xff]
    %v140 = vld [vmem:[#allocation5 + $0x180] sm:$0xff]
    %v141 = vld [vmem:[#allocation5 + $0x188] sm:$0xff]
    %v142 = vld [vmem:[#allocation5 + $0x190] sm:$0xff]
    %v143 = vld [vmem:[#allocation5 + $0x198] sm:$0xff]
    %v144 = vld [vmem:[#allocation5 + $0x1a0] sm:$0xff]
    %v145 = vld [vmem:[#allocation5 + $0x1a8] sm:$0xff]
    %v146 = vld [vmem:[#allocation5 + $0x1b0] sm:$0xff]
    %v147 = vld [vmem:[#allocation5 + $0x1b8] sm:$0xff]
    %v148 = vld [vmem:[#allocation5 + $0x1c0] sm:$0xff]
    %v149 = vld [vmem:[#allocation5 + $0x1c8] sm:$0xff]
    %v150 = vld [vmem:[#allocation5 + $0x1d0] sm:$0xff]
    %v151 = vld [vmem:[#allocation5 + $0x1d8] sm:$0xff]
    %v152 = vld [vmem:[#allocation5 + $0x1e0] sm:$0xff]
    %v153 = vld [vmem:[#allocation5 + $0x1e8] sm:$0xff]
    %v154 = vld [vmem:[#allocation5 + $0x1f0] sm:$0xff]
    %v155 = vld [vmem:[#allocation5 + $0x1f8] sm:$0xff]
    %v156 = vld [vmem:[#allocation5 + $0x200] sm:$0xff]
    %v157 = vld [vmem:[#allocation5 + $0x208] sm:$0xff]
    %v158 = vld [vmem:[#allocation5 + $0x210] sm:$0xff]
    %v159 = vld [vmem:[#allocation5 + $0x218] sm:$0xff]
    %v160 = vld [vmem:[#allocation5 + $0x220] sm:$0xff]
    %v161 = vld [vmem:[#allocation5 + $0x228] sm:$0xff]
    %v162 = vld [vmem:[#allocation5 + $0x230] sm:$0xff]
    %v163 = vld [vmem:[#allocation5 + $0x238] sm:$0xff]
    %v164 = vld [vmem:[#allocation5 + $0x240] sm:$0xff]
    %v165 = vld [vmem:[#allocation5 + $0x248] sm:$0xff]
    %v166 = vld [vmem:[#allocation5 + $0x250] sm:$0xff]
    %v167 = vld [vmem:[#allocation5 + $0x258] sm:$0xff]
    %v168 = vld [vmem:[#allocation5 + $0x260] sm:$0xff]
    %v169 = vld [vmem:[#allocation5 + $0x268] sm:$0xff]
    %v170 = vld [vmem:[#allocation5 + $0x270] sm:$0xff]
    %v171 = vld [vmem:[#allocation5 + $0x278] sm:$0xff]
    %v172 = vld [vmem:[#allocation5 + $0x280] sm:$0xff]
    %v173 = vld [vmem:[#allocation5 + $0x288] sm:$0xff]
    %v174 = vld [vmem:[#allocation5 + $0x290] sm:$0xff]
    %v175 = vld [vmem:[#allocation5 + $0x298] sm:$0xff]
    %v176 = vld [vmem:[#allocation5 + $0x2a0] sm:$0xff]
    %v177 = vld [vmem:[#allocation5 + $0x2a8] sm:$0xff]
    %v178 = vld [vmem:[#allocation5 + $0x2b0] sm:$0xff]
    %v179 = vld [vmem:[#allocation5 + $0x2b8] sm:$0xff]
    %v180 = vld [vmem:[#allocation5 + $0x2c0] sm:$0xff]
    %v181 = vld [vmem:[#allocation5 + $0x2c8] sm:$0xff]
    %v182 = vld [vmem:[#allocation5 + $0x2d0] sm:$0xff]
    %v183 = vld [vmem:[#allocation5 + $0x2d8] sm:$0xff]
    %v184 = vld [vmem:[#allocation5 + $0x2e0] sm:$0xff]
    %v185 = vld [vmem:[#allocation5 + $0x2e8] sm:$0xff]
    %v186 = vld [vmem:[#allocation5 + $0x2f0] sm:$0xff]
    %v187 = vld [vmem:[#allocation5 + $0x2f8] sm:$0xff]
    %v188 = vld [vmem:[#allocation5 + $0x300] sm:$0xff]
    %v189 = vld [vmem:[#allocation5 + $0x308] sm:$0xff]
    %v190 = vld [vmem:[#allocation5 + $0x310] sm:$0xff]
    %v191 = vld [vmem:[#allocation5 + $0x318] sm:$0xff]
    %v192 = vld [vmem:[#allocation5 + $0x320] sm:$0xff]
    %v193 = vld [vmem:[#allocation5 + $0x328] sm:$0xff]
    %v194 = vld [vmem:[#allocation5 + $0x330] sm:$0xff]
    %v195 = vld [vmem:[#allocation5 + $0x338] sm:$0xff]
    %v196 = vld [vmem:[#allocation5 + $0x340] sm:$0xff]
    %v197 = vld [vmem:[#allocation5 + $0x348] sm:$0xff]
    %v198 = vld [vmem:[#allocation5 + $0x350] sm:$0xff]
    %v199 = vld [vmem:[#allocation5 + $0x358] sm:$0xff]
    %v200 = vld [vmem:[#allocation5 + $0x360] sm:$0xff]
    %v201 = vld [vmem:[#allocation5 + $0x368] sm:$0xff]
    %v202 = vld [vmem:[#allocation5 + $0x370] sm:$0xff]
    %v203 = vld [vmem:[#allocation5 + $0x378] sm:$0xff]
    %v204 = vld [vmem:[#allocation5 + $0x380] sm:$0xff]
    %v205 = vld [vmem:[#allocation5 + $0x388] sm:$0xff]
    %v206 = vld [vmem:[#allocation5 + $0x390] sm:$0xff]
    %v207 = vld [vmem:[#allocation5 + $0x398] sm:$0xff]
    %v208 = vld [vmem:[#allocation5 + $0x3a0] sm:$0xff]
    %v209 = vld [vmem:[#allocation5 + $0x3a8] sm:$0xff]
    %v210 = vld [vmem:[#allocation5 + $0x3b0] sm:$0xff]
    %v211 = vld [vmem:[#allocation5 + $0x3b8] sm:$0xff]
    %v212 = vld [vmem:[#allocation5 + $0x3c0] sm:$0xff]
    %v213 = vld [vmem:[#allocation5 + $0x3c8] sm:$0xff]
    %v214 = vld [vmem:[#allocation5 + $0x3d0] sm:$0xff]
    %v215 = vld [vmem:[#allocation5 + $0x3d8] sm:$0xff]
    %v216 = vld [vmem:[#allocation5 + $0x3e0] sm:$0xff]
    %v217 = vld [vmem:[#allocation5 + $0x3e8] sm:$0xff]
    %v218 = vld [vmem:[#allocation5 + $0x3f0] sm:$0xff]
    %v219 = vld [vmem:[#allocation5 + $0x3f8] sm:$0xff]
    %v220 = vld [vmem:[#allocation5 + $0x400] sm:$0xff]
    %v221 = vld [vmem:[#allocation5 + $0x408] sm:$0xff]
    %v222 = vld [vmem:[#allocation5 + $0x410] sm:$0xff]
    %v223 = vld [vmem:[#allocation5 + $0x418] sm:$0xff]
    %v224 = vld [vmem:[#allocation5 + $0x420] sm:$0xff]
    %v225 = vld [vmem:[#allocation5 + $0x428] sm:$0xff]
    %v226 = vld [vmem:[#allocation5 + $0x430] sm:$0xff]
    %v227 = vld [vmem:[#allocation5 + $0x438] sm:$0xff]
    %v228 = vld [vmem:[#allocation5 + $0x440] sm:$0xff]
    %v229 = vld [vmem:[#allocation5 + $0x448] sm:$0xff]
    %v230 = vld [vmem:[#allocation5 + $0x450] sm:$0xff]
    %v231 = vld [vmem:[#allocation5 + $0x458] sm:$0xff]
    %v232 = vld [vmem:[#allocation5 + $0x460] sm:$0xff]
    %v233 = vld [vmem:[#allocation5 + $0x468] sm:$0xff]
    %v234 = vld [vmem:[#allocation5 + $0x470] sm:$0xff]
    %v235 = vld [vmem:[#allocation5 + $0x478] sm:$0xff]
    %v236 = vld [vmem:[#allocation5 + $0x480] sm:$0xff]
    %v237 = vld [vmem:[#allocation5 + $0x488] sm:$0xff]
    %v238 = vld [vmem:[#allocation5 + $0x490] sm:$0xff]
    %v239 = vld [vmem:[#allocation5 + $0x498] sm:$0xff]
    %v240 = vld [vmem:[#allocation5 + $0x4a0] sm:$0xff]
    %v241 = vld [vmem:[#allocation5 + $0x4a8] sm:$0xff]
    %v242 = vld [vmem:[#allocation5 + $0x4b0] sm:$0xff]
    %v243 = vld [vmem:[#allocation5 + $0x4b8] sm:$0xff]
    %v244 = vld [vmem:[#allocation5 + $0x4c0] sm:$0xff]
    %v245 = vld [vmem:[#allocation5 + $0x4c8] sm:$0xff]
    %v246 = vld [vmem:[#allocation5 + $0x4d0] sm:$0xff]
    %v247 = vld [vmem:[#allocation5 + $0x4d8] sm:$0xff]
    %v248 = vld [vmem:[#allocation5 + $0x4e0] sm:$0xff]
    %v249 = vld [vmem:[#allocation5 + $0x4e8] sm:$0xff]
    %v250 = vld [vmem:[#allocation5 + $0x4f0] sm:$0xff]
    %v251 = vld [vmem:[#allocation5 + $0x4f8] sm:$0xff]
    %v252 = vld [vmem:[#allocation5 + $0x500] sm:$0xff]
    %v253 = vld [vmem:[#allocation5 + $0x508] sm:$0xff]
    %v254 = vld [vmem:[#allocation5 + $0x510] sm:$0xff]
    %v255 = vld [vmem:[#allocation5 + $0x518] sm:$0xff]
    %v256 = vld [vmem:[#allocation5 + $0x520] sm:$0xff]
    %v257 = vld [vmem:[#allocation5 + $0x528] sm:$0xff]
    %v258 = vld [vmem:[#allocation5 + $0x530] sm:$0xff]
    %v259 = vld [vmem:[#allocation5 + $0x538] sm:$0xff]
    %v260 = vld [vmem:[#allocation5 + $0x540] sm:$0xff]
    %v261 = vld [vmem:[#allocation5 + $0x548] sm:$0xff]
    %v262 = vld [vmem:[#allocation5 + $0x550] sm:$0xff]
    %v263 = vld [vmem:[#allocation5 + $0x558] sm:$0xff]
    %v264 = vld [vmem:[#allocation5 + $0x560] sm:$0xff]
    %v265 = vld [vmem:[#allocation5 + $0x568] sm:$0xff]
    %v266 = vld [vmem:[#allocation5 + $0x570] sm:$0xff]
    %v267 = vld [vmem:[#allocation5 + $0x578] sm:$0xff]
    %v268 = vld [vmem:[#allocation5 + $0x580] sm:$0xff]
    %v269 = vld [vmem:[#allocation5 + $0x588] sm:$0xff]
    %v270 = vld [vmem:[#allocation5 + $0x590] sm:$0xff]
    %v271 = vld [vmem:[#allocation5 + $0x598] sm:$0xff]
    %v272 = vld [vmem:[#allocation5 + $0x5a0] sm:$0xff]
    %v273 = vld [vmem:[#allocation5 + $0x5a8] sm:$0xff]
    %v274 = vld [vmem:[#allocation5 + $0x5b0] sm:$0xff]
    %v275 = vld [vmem:[#allocation5 + $0x5b8] sm:$0xff]
    %v276 = vld [vmem:[#allocation5 + $0x5c0] sm:$0xff]
    %v277 = vld [vmem:[#allocation5 + $0x5c8] sm:$0xff]
    %v278 = vld [vmem:[#allocation5 + $0x5d0] sm:$0xff]
    %v279 = vld [vmem:[#allocation5 + $0x5d8] sm:$0xff]
    %v280 = vld [vmem:[#allocation5 + $0x5e0] sm:$0xff]
    %v281 = vld [vmem:[#allocation5 + $0x5e8] sm:$0xff]
    %v282 = vld [vmem:[#allocation5 + $0x5f0] sm:$0xff]
    %v283 = vld [vmem:[#allocation5 + $0x5f8] sm:$0xff]
    %v284 = vld [vmem:[#allocation5 + $0x600] sm:$0xff]
    %v285 = vld [vmem:[#allocation5 + $0x608] sm:$0xff]
    %v286 = vld [vmem:[#allocation5 + $0x610] sm:$0xff]
    %v287 = vld [vmem:[#allocation5 + $0x618] sm:$0xff]
    %v288 = vld [vmem:[#allocation5 + $0x620] sm:$0xff]
    %v289 = vld [vmem:[#allocation5 + $0x628] sm:$0xff]
    %v290 = vld [vmem:[#allocation5 + $0x630] sm:$0xff]
    %v291 = vld [vmem:[#allocation5 + $0x638] sm:$0xff]
    %v292 = vld [vmem:[#allocation7] sm:$0xff]
    %v293 = vld [vmem:[#allocation7 + $0x8] sm:$0x3]
    %v296 = vlaneseq
    %v297 = vshrl.u32 %v296, 7
    %v298 = vsub.s32 0, %v297
    %v299 = vrot.slane %v292, %v298
    %v300 = vlaneseq
    %v301 = vshrl.u32 %v300, 7
    %v302 = vsub.s32 1, %v301
    %v303 = vrot.slane %v292, %v302
    %v304 = vlaneseq
    %v305 = vshrl.u32 %v304, 7
    %v306 = vsub.s32 2, %v305
    %v307 = vrot.slane %v292, %v306
    %v308 = vlaneseq
    %v309 = vshrl.u32 %v308, 7
    %v310 = vsub.s32 3, %v309
    %v311 = vrot.slane %v292, %v310
    %v312 = vlaneseq
    %v313 = vshrl.u32 %v312, 7
    %v314 = vsub.s32 4, %v313
    %v315 = vrot.slane %v292, %v314
    %v316 = vlaneseq
    %v317 = vshrl.u32 %v316, 7
    %v318 = vsub.s32 5, %v317
    %v319 = vrot.slane %v292, %v318
    %v320 = vlaneseq
    %v321 = vshrl.u32 %v320, 7
    %v322 = vsub.s32 6, %v321
    %v323 = vrot.slane %v292, %v322
    %v324 = vlaneseq
    %v325 = vshrl.u32 %v324, 7
    %v326 = vsub.s32 7, %v325
    %v327 = vrot.slane %v292, %v326
    %v328 = vlaneseq
    %v329 = vshrl.u32 %v328, 7
    %v330 = vsub.s32 0, %v329
    %v331 = vrot.slane %v293, %v330
    %v332 = vlaneseq
    %v333 = vshrl.u32 %v332, 7
    %v334 = vsub.s32 1, %v333
    %v335 = vrot.slane %v293, %v334
    %v348 = vunpack.c.l.s4 1983009808
    %v349 = vunpack.c.0.s8 %v348
    %v350 = vlaneseq
    %v351 = vshrl.u32 %v350, 7
    %v352 = vsub.s32 %v349, %v351
    %v353 = vrot.slane %v91, %v352
    %v354 = vcombine.high %v353, %v353
    %vm356 = vcmask 261120
    %v357 = vsel %vm356, %v354, 0
    %359 = vmatprep.subr.mxu0 %v243
    %360 = vmatpush1.msra.mxu0 %v242
    %361 = vmatprep.subr.mxu0 %v233
    %362 = vmatpush1.msra.mxu0 %v232
    %363 = vmatprep.subr.mxu0 %v223
    %364 = vmatpush1.msra.mxu0 %v222
    %365 = vmatprep.subr.mxu0 %v213
    %366 = vmatpush1.msra.mxu0 %v212
    %367 = vmatprep.subr.mxu0 %v203
    %368 = vmatpush1.msra.mxu0 %v202
    %369 = vmatprep.subr.mxu0 %v193
    %370 = vmatpush1.msra.mxu0 %v192
    %371 = vmatprep.subr.mxu0 %v183
    %372 = vmatpush1.msra.mxu0 %v182
    %373 = vmatprep.subr.mxu0 %v173
    %374 = vmatpush1.msra.mxu0 %v172
    %375 = vmatprep.subr.mxu0 %v163
    %376 = vmatpush1.msra.mxu0 %v162
    %377 = vmatprep.subr.mxu0 %v153
    %378 = vmatpush1.msra.mxu0 %v152
    %379 = vmatprep.subr.mxu0 %v143
    %380 = vmatpush1.msra.mxu0 %v142
    %381 = vmatprep.subr.mxu0 %v133
    %382 = vmatpush1.msra.mxu0 %v132
    %383 = vmatprep.subr.mxu0 %v123
    %384 = vmatpush1.msra.mxu0 %v122
    %385 = vmatprep.subr.mxu0 %v113
    %386 = vmatpush1.msra.mxu0 %v112
    %387 = vmatprep.subr.mxu0 %v103
    %388 = vmatpush1.msra.mxu0 %v102
    %389 = vmatprep.subr.mxu0 %v93
    %390 = vmatpush1.msra.mxu0 %v92
    %391 = vmatprep.subr.mxu0 0.0
    %392 = vmatpush2.msra.mxu0 0.0
    %393 = vmatprep.subr.mxu0 0.0
    %394 = vmatpush2.msra.mxu0 0.0
    %395 = vmatprep.subr.mxu0 0.0
    %396 = vmatpush2.msra.mxu0 0.0
    %397 = vmatprep.subr.mxu0 0.0
    %398 = vmatpush2.msra.mxu0 0.0
    %399 = vmatprep.subr.mxu0 0.0
    %400 = vmatpush2.msra.mxu0 0.0
    %401 = vmatprep.subr.mxu0 0.0
    %402 = vmatpush2.msra.mxu0 0.0
    %403 = vmatprep.subr.mxu0 0.0
    %404 = vmatpush2.msra.mxu0 0.0
    %405 = vmatprep.subr.mxu0 0.0
    %406 = vmatpush2.msra.mxu0 0.0
    %407 = vmatprep.subr.mxu0 0.0
    %408 = vmatpush2.msra.mxu0 0.0
    %409 = vmatprep.subr.mxu0 0.0
    %410 = vmatpush2.msra.mxu0 0.0
    %411 = vmatprep.subr.mxu0 0.0
    %412 = vmatpush2.msra.mxu0 0.0
    %413 = vmatprep.subr.mxu0 0.0
    %414 = vmatpush2.msra.mxu0 0.0
    %415 = vmatprep.subr.mxu0 %v283
    %416 = vmatpush2.msra.mxu0 %v282
    %417 = vmatprep.subr.mxu0 %v273
    %418 = vmatpush2.msra.mxu0 %v272
    %419 = vmatprep.subr.mxu0 %v263
    %420 = vmatpush2.msra.mxu0 %v262
    %421 = vmatprep.subr.mxu0 %v253
    %422 = vmatpush2.msra.mxu0 %v252
    %423 = vmatprep.mubr.f32.mxu0 %v357
    %424 = vmatmul.mubr.f32.gmra.mxu0 %v353
    %v425 = vpop.f32.mrf.mxu0
    %v426 = vadd.f32 %v299, %v425
    %v427 = vpop.f32.mrf.mxu0
    %v428 = vadd.f32 %v303, %v427
    %429 = vdwg.mxu0
    %430 = vmatprep.subr.mxu0 %v245
    %431 = vmatpush1.msra.mxu0 %v244
    %432 = vmatprep.subr.mxu0 %v235
    %433 = vmatpush1.msra.mxu0 %v234
    %434 = vmatprep.subr.mxu0 %v225
    %435 = vmatpush1.msra.mxu0 %v224
    %436 = vmatprep.subr.mxu0 %v215
    %437 = vmatpush1.msra.mxu0 %v214
    %438 = vmatprep.subr.mxu0 %v205
    %439 = vmatpush1.msra.mxu0 %v204
    %440 = vmatprep.subr.mxu0 %v195
    %441 = vmatpush1.msra.mxu0 %v194
    %442 = vmatprep.subr.mxu0 %v185
    %443 = vmatpush1.msra.mxu0 %v184
    %444 = vmatprep.subr.mxu0 %v175
    %445 = vmatpush1.msra.mxu0 %v174
    %446 = vmatprep.subr.mxu0 %v165
    %447 = vmatpush1.msra.mxu0 %v164
    %448 = vmatprep.subr.mxu0 %v155
    %449 = vmatpush1.msra.mxu0 %v154
    %450 = vmatprep.subr.mxu0 %v145
    %451 = vmatpush1.msra.mxu0 %v144
    %452 = vmatprep.subr.mxu0 %v135
    %453 = vmatpush1.msra.mxu0 %v134
    %454 = vmatprep.subr.mxu0 %v125
    %455 = vmatpush1.msra.mxu0 %v124
    %456 = vmatprep.subr.mxu0 %v115
    %457 = vmatpush1.msra.mxu0 %v114
    %458 = vmatprep.subr.mxu0 %v105
    %459 = vmatpush1.msra.mxu0 %v104
    %460 = vmatprep.subr.mxu0 %v95
    %461 = vmatpush1.msra.mxu0 %v94
    %462 = vmatprep.subr.mxu0 0.0
    %463 = vmatpush2.msra.mxu0 0.0
    %464 = vmatprep.subr.mxu0 0.0
    %465 = vmatpush2.msra.mxu0 0.0
    %466 = vmatprep.subr.mxu0 0.0
    %467 = vmatpush2.msra.mxu0 0.0
    %468 = vmatprep.subr.mxu0 0.0
    %469 = vmatpush2.msra.mxu0 0.0
    %470 = vmatprep.subr.mxu0 0.0
    %471 = vmatpush2.msra.mxu0 0.0
    %472 = vmatprep.subr.mxu0 0.0
    %473 = vmatpush2.msra.mxu0 0.0
    %474 = vmatprep.subr.mxu0 0.0
    %475 = vmatpush2.msra.mxu0 0.0
    %476 = vmatprep.subr.mxu0 0.0
    %477 = vmatpush2.msra.mxu0 0.0
    %478 = vmatprep.subr.mxu0 0.0
    %479 = vmatpush2.msra.mxu0 0.0
    %480 = vmatprep.subr.mxu0 0.0
    %481 = vmatpush2.msra.mxu0 0.0
    %482 = vmatprep.subr.mxu0 0.0
    %483 = vmatpush2.msra.mxu0 0.0
    %484 = vmatprep.subr.mxu0 0.0
    %485 = vmatpush2.msra.mxu0 0.0
    %486 = vmatprep.subr.mxu0 %v285
    %487 = vmatpush2.msra.mxu0 %v284
    %488 = vmatprep.subr.mxu0 %v275
    %489 = vmatpush2.msra.mxu0 %v274
    %490 = vmatprep.subr.mxu0 %v265
    %491 = vmatpush2.msra.mxu0 %v264
    %492 = vmatprep.subr.mxu0 %v255
    %493 = vmatpush2.msra.mxu0 %v254
    %494 = vmatprep.mubr.f32.mxu0 %v357
    %495 = vmatmul.mubr.f32.gmra.mxu0 %v353
    %v496 = vpop.f32.mrf.mxu0
    %v497 = vadd.f32 %v307, %v496
    %v498 = vpop.f32.mrf.mxu0
    %v499 = vadd.f32 %v311, %v498
    %500 = vdwg.mxu0
    %501 = vmatprep.subr.mxu0 %v247
    %502 = vmatpush1.msra.mxu0 %v246
    %503 = vmatprep.subr.mxu0 %v237
    %504 = vmatpush1.msra.mxu0 %v236
    %505 = vmatprep.subr.mxu0 %v227
    %506 = vmatpush1.msra.mxu0 %v226
    %507 = vmatprep.subr.mxu0 %v217
    %508 = vmatpush1.msra.mxu0 %v216
    %509 = vmatprep.subr.mxu0 %v207
    %510 = vmatpush1.msra.mxu0 %v206
    %511 = vmatprep.subr.mxu0 %v197
    %512 = vmatpush1.msra.mxu0 %v196
    %513 = vmatprep.subr.mxu0 %v187
    %514 = vmatpush1.msra.mxu0 %v186
    %515 = vmatprep.subr.mxu0 %v177
    %516 = vmatpush1.msra.mxu0 %v176
    %517 = vmatprep.subr.mxu0 %v167
    %518 = vmatpush1.msra.mxu0 %v166
    %519 = vmatprep.subr.mxu0 %v157
    %520 = vmatpush1.msra.mxu0 %v156
    %521 = vmatprep.subr.mxu0 %v147
    %522 = vmatpush1.msra.mxu0 %v146
    %523 = vmatprep.subr.mxu0 %v137
    %524 = vmatpush1.msra.mxu0 %v136
    %525 = vmatprep.subr.mxu0 %v127
    %526 = vmatpush1.msra.mxu0 %v126
    %527 = vmatprep.subr.mxu0 %v117
    %528 = vmatpush1.msra.mxu0 %v116
    %529 = vmatprep.subr.mxu0 %v107
    %530 = vmatpush1.msra.mxu0 %v106
    %531 = vmatprep.subr.mxu0 %v97
    %532 = vmatpush1.msra.mxu0 %v96
    %533 = vmatprep.subr.mxu0 0.0
    %534 = vmatpush2.msra.mxu0 0.0
    %535 = vmatprep.subr.mxu0 0.0
    %536 = vmatpush2.msra.mxu0 0.0
    %537 = vmatprep.subr.mxu0 0.0
    %538 = vmatpush2.msra.mxu0 0.0
    %539 = vmatprep.subr.mxu0 0.0
    %540 = vmatpush2.msra.mxu0 0.0
    %541 = vmatprep.subr.mxu0 0.0
    %542 = vmatpush2.msra.mxu0 0.0
    %543 = vmatprep.subr.mxu0 0.0
    %544 = vmatpush2.msra.mxu0 0.0
    %545 = vmatprep.subr.mxu0 0.0
    %546 = vmatpush2.msra.mxu0 0.0
    %547 = vmatprep.subr.mxu0 0.0
    %548 = vmatpush2.msra.mxu0 0.0
    %549 = vmatprep.subr.mxu0 0.0
    %550 = vmatpush2.msra.mxu0 0.0
    %551 = vmatprep.subr.mxu0 0.0
    %552 = vmatpush2.msra.mxu0 0.0
    %553 = vmatprep.subr.mxu0 0.0
    %554 = vmatpush2.msra.mxu0 0.0
    %555 = vmatprep.subr.mxu0 0.0
    %556 = vmatpush2.msra.mxu0 0.0
    %557 = vmatprep.subr.mxu0 %v287
    %558 = vmatpush2.msra.mxu0 %v286
    %559 = vmatprep.subr.mxu0 %v277
    %560 = vmatpush2.msra.mxu0 %v276
    %561 = vmatprep.subr.mxu0 %v267
    %562 = vmatpush2.msra.mxu0 %v266
    %563 = vmatprep.subr.mxu0 %v257
    %564 = vmatpush2.msra.mxu0 %v256
    %565 = vmatprep.mubr.f32.mxu0 %v357
    %566 = vmatmul.mubr.f32.gmra.mxu0 %v353
    %v567 = vpop.f32.mrf.mxu0
    %v568 = vadd.f32 %v315, %v567
    %v569 = vpop.f32.mrf.mxu0
    %v570 = vadd.f32 %v319, %v569
    %571 = vdwg.mxu0
    %572 = vmatprep.subr.mxu0 %v249
    %573 = vmatpush1.msra.mxu0 %v248
    %574 = vmatprep.subr.mxu0 %v239
    %575 = vmatpush1.msra.mxu0 %v238
    %576 = vmatprep.subr.mxu0 %v229
    %577 = vmatpush1.msra.mxu0 %v228
    %578 = vmatprep.subr.mxu0 %v219
    %579 = vmatpush1.msra.mxu0 %v218
    %580 = vmatprep.subr.mxu0 %v209
    %581 = vmatpush1.msra.mxu0 %v208
    %582 = vmatprep.subr.mxu0 %v199
    %583 = vmatpush1.msra.mxu0 %v198
    %584 = vmatprep.subr.mxu0 %v189
    %585 = vmatpush1.msra.mxu0 %v188
    %586 = vmatprep.subr.mxu0 %v179
    %587 = vmatpush1.msra.mxu0 %v178
    %588 = vmatprep.subr.mxu0 %v169
    %589 = vmatpush1.msra.mxu0 %v168
    %590 = vmatprep.subr.mxu0 %v159
    %591 = vmatpush1.msra.mxu0 %v158
    %592 = vmatprep.subr.mxu0 %v149
    %593 = vmatpush1.msra.mxu0 %v148
    %594 = vmatprep.subr.mxu0 %v139
    %595 = vmatpush1.msra.mxu0 %v138
    %596 = vmatprep.subr.mxu0 %v129
    %597 = vmatpush1.msra.mxu0 %v128
    %598 = vmatprep.subr.mxu0 %v119
    %599 = vmatpush1.msra.mxu0 %v118
    %600 = vmatprep.subr.mxu0 %v109
    %601 = vmatpush1.msra.mxu0 %v108
    %602 = vmatprep.subr.mxu0 %v99
    %603 = vmatpush1.msra.mxu0 %v98
    %604 = vmatprep.subr.mxu0 0.0
    %605 = vmatpush2.msra.mxu0 0.0
    %606 = vmatprep.subr.mxu0 0.0
    %607 = vmatpush2.msra.mxu0 0.0
    %608 = vmatprep.subr.mxu0 0.0
    %609 = vmatpush2.msra.mxu0 0.0
    %610 = vmatprep.subr.mxu0 0.0
    %611 = vmatpush2.msra.mxu0 0.0
    %612 = vmatprep.subr.mxu0 0.0
    %613 = vmatpush2.msra.mxu0 0.0
    %614 = vmatprep.subr.mxu0 0.0
    %615 = vmatpush2.msra.mxu0 0.0
    %616 = vmatprep.subr.mxu0 0.0
    %617 = vmatpush2.msra.mxu0 0.0
    %618 = vmatprep.subr.mxu0 0.0
    %619 = vmatpush2.msra.mxu0 0.0
    %620 = vmatprep.subr.mxu0 0.0
    %621 = vmatpush2.msra.mxu0 0.0
    %622 = vmatprep.subr.mxu0 0.0
    %623 = vmatpush2.msra.mxu0 0.0
    %624 = vmatprep.subr.mxu0 0.0
    %625 = vmatpush2.msra.mxu0 0.0
    %626 = vmatprep.subr.mxu0 0.0
    %627 = vmatpush2.msra.mxu0 0.0
    %628 = vmatprep.subr.mxu0 %v289
    %629 = vmatpush2.msra.mxu0 %v288
    %630 = vmatprep.subr.mxu0 %v279
    %631 = vmatpush2.msra.mxu0 %v278
    %632 = vmatprep.subr.mxu0 %v269
    %633 = vmatpush2.msra.mxu0 %v268
    %634 = vmatprep.subr.mxu0 %v259
    %635 = vmatpush2.msra.mxu0 %v258
    %636 = vmatprep.mubr.f32.mxu0 %v357
    %637 = vmatmul.mubr.f32.gmra.mxu0 %v353
    %v638 = vpop.f32.mrf.mxu0
    %v639 = vadd.f32 %v323, %v638
    %v640 = vpop.f32.mrf.mxu0
    %v641 = vadd.f32 %v327, %v640
    %642 = vdwg.mxu0
    %643 = vmatprep.subr.mxu0 %v251
    %644 = vmatpush1.msra.mxu0 %v250
    %645 = vmatprep.subr.mxu0 %v241
    %646 = vmatpush1.msra.mxu0 %v240
    %647 = vmatprep.subr.mxu0 %v231
    %648 = vmatpush1.msra.mxu0 %v230
    %649 = vmatprep.subr.mxu0 %v221
    %650 = vmatpush1.msra.mxu0 %v220
    %651 = vmatprep.subr.mxu0 %v211
    %652 = vmatpush1.msra.mxu0 %v210
    %653 = vmatprep.subr.mxu0 %v201
    %654 = vmatpush1.msra.mxu0 %v200
    %655 = vmatprep.subr.mxu0 %v191
    %656 = vmatpush1.msra.mxu0 %v190
    %657 = vmatprep.subr.mxu0 %v181
    %658 = vmatpush1.msra.mxu0 %v180
    %659 = vmatprep.subr.mxu0 %v171
    %660 = vmatpush1.msra.mxu0 %v170
    %661 = vmatprep.subr.mxu0 %v161
    %662 = vmatpush1.msra.mxu0 %v160
    %663 = vmatprep.subr.mxu0 %v151
    %664 = vmatpush1.msra.mxu0 %v150
    %665 = vmatprep.subr.mxu0 %v141
    %666 = vmatpush1.msra.mxu0 %v140
    %667 = vmatprep.subr.mxu0 %v131
    %668 = vmatpush1.msra.mxu0 %v130
    %669 = vmatprep.subr.mxu0 %v121
    %670 = vmatpush1.msra.mxu0 %v120
    %671 = vmatprep.subr.mxu0 %v111
    %672 = vmatpush1.msra.mxu0 %v110
    %673 = vmatprep.subr.mxu0 %v101
    %674 = vmatpush1.msra.mxu0 %v100
    %675 = vmatprep.subr.mxu0 0.0
    %676 = vmatpush2.msra.mxu0 0.0
    %677 = vmatprep.subr.mxu0 0.0
    %678 = vmatpush2.msra.mxu0 0.0
    %679 = vmatprep.subr.mxu0 0.0
    %680 = vmatpush2.msra.mxu0 0.0
    %681 = vmatprep.subr.mxu0 0.0
    %682 = vmatpush2.msra.mxu0 0.0
    %683 = vmatprep.subr.mxu0 0.0
    %684 = vmatpush2.msra.mxu0 0.0
    %685 = vmatprep.subr.mxu0 0.0
    %686 = vmatpush2.msra.mxu0 0.0
    %687 = vmatprep.subr.mxu0 0.0
    %688 = vmatpush2.msra.mxu0 0.0
    %689 = vmatprep.subr.mxu0 0.0
    %690 = vmatpush2.msra.mxu0 0.0
    %691 = vmatprep.subr.mxu0 0.0
    %692 = vmatpush2.msra.mxu0 0.0
    %693 = vmatprep.subr.mxu0 0.0
    %694 = vmatpush2.msra.mxu0 0.0
    %695 = vmatprep.subr.mxu0 0.0
    %696 = vmatpush2.msra.mxu0 0.0
    %697 = vmatprep.subr.mxu0 0.0
    %698 = vmatpush2.msra.mxu0 0.0
    %699 = vmatprep.subr.mxu0 %v291
    %700 = vmatpush2.msra.mxu0 %v290
    %701 = vmatprep.subr.mxu0 %v281
    %702 = vmatpush2.msra.mxu0 %v280
    %703 = vmatprep.subr.mxu0 %v271
    %704 = vmatpush2.msra.mxu0 %v270
    %705 = vmatprep.subr.mxu0 %v261
    %706 = vmatpush2.msra.mxu0 %v260
    %707 = vmatprep.mubr.f32.mxu0 %v357
    %708 = vmatmul.mubr.f32.gmra.mxu0 %v353
    %v709 = vpop.f32.mrf.mxu0
    %v710 = vadd.f32 %v331, %v709
    %v711 = vpop.f32.mrf.mxu0
    %v712 = vadd.f32 %v335, %v711
    %713 = vdwg.mxu0
    %v714 = vmax.f32 %v426, 0.0
    %v715 = vmax.f32 %v428, 0.0
    %v716 = vmax.f32 %v497, 0.0
    %v717 = vmax.f32 %v499, 0.0
    %v718 = vmax.f32 %v568, 0.0
    %v719 = vmax.f32 %v570, 0.0
    %v720 = vmax.f32 %v639, 0.0
    %v721 = vmax.f32 %v641, 0.0
    %v722 = vmax.f32 %v710, 0.0
    %v723 = vmax.f32 %v712, 0.0
    %v724 = vmax.f32 %v714, %v719
    %v725 = vmax.f32 %v715, %v720
    %v726 = vmax.f32 %v716, %v721
    %v727 = vmax.f32 %v717, %v722
    %v728 = vmax.f32 %v718, %v723
    %v729 = vld [vmem:[#allocation8] sm:$0xff]
    %v730 = vld [vmem:[#allocation8 + $0x8] sm:$0xff]
    %v731 = vld [vmem:[#allocation8 + $0x10] sm:$0xff]
    %v732 = vld [vmem:[#allocation8 + $0x18] sm:$0xff]
    %v733 = vld [vmem:[#allocation8 + $0x20] sm:$0xff]
    %v734 = vld [vmem:[#allocation8 + $0x28] sm:$0xff]
    %v735 = vld [vmem:[#allocation8 + $0x30] sm:$0xff]
    %v736 = vld [vmem:[#allocation8 + $0x38] sm:$0xff]
    %v737 = vld [vmem:[#allocation8 + $0x40] sm:$0xff]
    %v738 = vld [vmem:[#allocation8 + $0x48] sm:$0xff]
    %v739 = vld [vmem:[#allocation8 + $0x50] sm:$0xff]
    %v740 = vld [vmem:[#allocation8 + $0x58] sm:$0xff]
    %v741 = vld [vmem:[#allocation8 + $0x60] sm:$0xff]
    %v742 = vld [vmem:[#allocation8 + $0x68] sm:$0xff]
    %v743 = vld [vmem:[#allocation8 + $0x70] sm:$0xff]
    %v744 = vld [vmem:[#allocation8 + $0x78] sm:$0xff]
    %v745 = vld [vmem:[#allocation8 + $0x80] sm:$0xff]
    %v746 = vld [vmem:[#allocation8 + $0x88] sm:$0xff]
    %v747 = vld [vmem:[#allocation8 + $0x90] sm:$0xff]
    %v748 = vld [vmem:[#allocation8 + $0x98] sm:$0xff]
    %v749 = vld [vmem:[#allocation8 + $0xa0] sm:$0xff]
    %v750 = vld [vmem:[#allocation8 + $0xa8] sm:$0xff]
    %v751 = vld [vmem:[#allocation8 + $0xb0] sm:$0xff]
    %v752 = vld [vmem:[#allocation8 + $0xb8] sm:$0xff]
    %v753 = vld [vmem:[#allocation8 + $0xc0] sm:$0xff]
    %v754 = vld [vmem:[#allocation8 + $0xc8] sm:$0xff]
    %v755 = vld [vmem:[#allocation8 + $0xd0] sm:$0xff]
    %v756 = vld [vmem:[#allocation8 + $0xd8] sm:$0xff]
    %v757 = vld [vmem:[#allocation8 + $0xe0] sm:$0xff]
    %v758 = vld [vmem:[#allocation8 + $0xe8] sm:$0xff]
    %v759 = vld [vmem:[#allocation8 + $0xf0] sm:$0xff]
    %v760 = vld [vmem:[#allocation8 + $0xf8] sm:$0xff]
    %v761 = vld [vmem:[#allocation8 + $0x100] sm:$0xff]
    %v762 = vld [vmem:[#allocation8 + $0x108] sm:$0xff]
    %v763 = vld [vmem:[#allocation8 + $0x110] sm:$0xff]
    %v764 = vld [vmem:[#allocation8 + $0x118] sm:$0xff]
    %v765 = vld [vmem:[#allocation8 + $0x120] sm:$0xff]
    %v766 = vld [vmem:[#allocation8 + $0x128] sm:$0xff]
    %v767 = vld [vmem:[#allocation8 + $0x130] sm:$0xff]
    %v768 = vld [vmem:[#allocation8 + $0x138] sm:$0xff]
    %v769 = vld [vmem:[#allocation8 + $0x140] sm:$0xff]
    %v770 = vld [vmem:[#allocation8 + $0x148] sm:$0xff]
    %v771 = vld [vmem:[#allocation8 + $0x150] sm:$0xff]
    %v772 = vld [vmem:[#allocation8 + $0x158] sm:$0xff]
    %v773 = vld [vmem:[#allocation8 + $0x160] sm:$0xff]
    %v774 = vld [vmem:[#allocation8 + $0x168] sm:$0xff]
    %v775 = vld [vmem:[#allocation8 + $0x170] sm:$0xff]
    %v776 = vld [vmem:[#allocation8 + $0x178] sm:$0xff]
    %v777 = vld [vmem:[#allocation8 + $0x180] sm:$0xff]
    %v778 = vld [vmem:[#allocation8 + $0x188] sm:$0xff]
    %v779 = vld [vmem:[#allocation8 + $0x190] sm:$0xff]
    %v780 = vld [vmem:[#allocation8 + $0x198] sm:$0xff]
    %v781 = vld [vmem:[#allocation8 + $0x1a0] sm:$0xff]
    %v782 = vld [vmem:[#allocation8 + $0x1a8] sm:$0xff]
    %v783 = vld [vmem:[#allocation8 + $0x1b0] sm:$0xff]
    %v784 = vld [vmem:[#allocation8 + $0x1b8] sm:$0xff]
    %v785 = vld [vmem:[#allocation8 + $0x1c0] sm:$0xff]
    %v786 = vld [vmem:[#allocation8 + $0x1c8] sm:$0xff]
    %v787 = vld [vmem:[#allocation8 + $0x1d0] sm:$0xff]
    %v788 = vld [vmem:[#allocation8 + $0x1d8] sm:$0xff]
    %v789 = vld [vmem:[#allocation8 + $0x1e0] sm:$0xff]
    %v790 = vld [vmem:[#allocation8 + $0x1e8] sm:$0xff]
    %v791 = vld [vmem:[#allocation8 + $0x1f0] sm:$0xff]
    %v792 = vld [vmem:[#allocation8 + $0x1f8] sm:$0xff]
    %v793 = vld [vmem:[#allocation8 + $0x200] sm:$0xff]
    %v794 = vld [vmem:[#allocation8 + $0x208] sm:$0xff]
    %v795 = vld [vmem:[#allocation8 + $0x210] sm:$0xff]
    %v796 = vld [vmem:[#allocation8 + $0x218] sm:$0xff]
    %v797 = vld [vmem:[#allocation8 + $0x220] sm:$0xff]
    %v798 = vld [vmem:[#allocation8 + $0x228] sm:$0xff]
    %v799 = vld [vmem:[#allocation8 + $0x230] sm:$0xff]
    %v800 = vld [vmem:[#allocation8 + $0x238] sm:$0xff]
    %v801 = vld [vmem:[#allocation8 + $0x240] sm:$0xff]
    %v802 = vld [vmem:[#allocation8 + $0x248] sm:$0xff]
    %v803 = vld [vmem:[#allocation8 + $0x250] sm:$0xff]
    %v804 = vld [vmem:[#allocation8 + $0x258] sm:$0xff]
    %v805 = vld [vmem:[#allocation8 + $0x260] sm:$0xff]
    %v806 = vld [vmem:[#allocation8 + $0x268] sm:$0xff]
    %v807 = vld [vmem:[#allocation8 + $0x270] sm:$0xff]
    %v808 = vld [vmem:[#allocation8 + $0x278] sm:$0xff]
    %v809 = vld [vmem:[#allocation8 + $0x280] sm:$0xff]
    %v810 = vld [vmem:[#allocation8 + $0x288] sm:$0xff]
    %v811 = vld [vmem:[#allocation8 + $0x290] sm:$0xff]
    %v812 = vld [vmem:[#allocation8 + $0x298] sm:$0xff]
    %v813 = vld [vmem:[#allocation8 + $0x2a0] sm:$0xff]
    %v814 = vld [vmem:[#allocation8 + $0x2a8] sm:$0xff]
    %v815 = vld [vmem:[#allocation8 + $0x2b0] sm:$0xff]
    %v816 = vld [vmem:[#allocation8 + $0x2b8] sm:$0xff]
    %v817 = vld [vmem:[#allocation8 + $0x2c0] sm:$0xff]
    %v818 = vld [vmem:[#allocation8 + $0x2c8] sm:$0xff]
    %v819 = vld [vmem:[#allocation8 + $0x2d0] sm:$0xff]
    %v820 = vld [vmem:[#allocation8 + $0x2d8] sm:$0xff]
    %v821 = vld [vmem:[#allocation8 + $0x2e0] sm:$0xff]
    %v822 = vld [vmem:[#allocation8 + $0x2e8] sm:$0xff]
    %v823 = vld [vmem:[#allocation8 + $0x2f0] sm:$0xff]
    %v824 = vld [vmem:[#allocation8 + $0x2f8] sm:$0xff]
    %v825 = vld [vmem:[#allocation8 + $0x300] sm:$0xff]
    %v826 = vld [vmem:[#allocation8 + $0x308] sm:$0xff]
    %v827 = vld [vmem:[#allocation8 + $0x310] sm:$0xff]
    %v828 = vld [vmem:[#allocation8 + $0x318] sm:$0xff]
    %v829 = vld [vmem:[#allocation8 + $0x320] sm:$0xff]
    %v830 = vld [vmem:[#allocation8 + $0x328] sm:$0xff]
    %v831 = vld [vmem:[#allocation8 + $0x330] sm:$0xff]
    %v832 = vld [vmem:[#allocation8 + $0x338] sm:$0xff]
    %v833 = vld [vmem:[#allocation8 + $0x340] sm:$0xff]
    %v834 = vld [vmem:[#allocation8 + $0x348] sm:$0xff]
    %v835 = vld [vmem:[#allocation8 + $0x350] sm:$0xff]
    %v836 = vld [vmem:[#allocation8 + $0x358] sm:$0xff]
    %v837 = vld [vmem:[#allocation8 + $0x360] sm:$0xff]
    %v838 = vld [vmem:[#allocation8 + $0x368] sm:$0xff]
    %v839 = vld [vmem:[#allocation8 + $0x370] sm:$0xff]
    %v840 = vld [vmem:[#allocation8 + $0x378] sm:$0xff]
    %v841 = vld [vmem:[#allocation8 + $0x380] sm:$0xff]
    %v842 = vld [vmem:[#allocation8 + $0x388] sm:$0xff]
    %v843 = vld [vmem:[#allocation8 + $0x390] sm:$0xff]
    %v844 = vld [vmem:[#allocation8 + $0x398] sm:$0xff]
    %v845 = vld [vmem:[#allocation8 + $0x3a0] sm:$0xff]
    %v846 = vld [vmem:[#allocation8 + $0x3a8] sm:$0xff]
    %v847 = vld [vmem:[#allocation8 + $0x3b0] sm:$0xff]
    %v848 = vld [vmem:[#allocation8 + $0x3b8] sm:$0xff]
    %v849 = vld [vmem:[#allocation8 + $0x3c0] sm:$0xff]
    %v850 = vld [vmem:[#allocation8 + $0x3c8] sm:$0xff]
    %v851 = vld [vmem:[#allocation8 + $0x3d0] sm:$0xff]
    %v852 = vld [vmem:[#allocation8 + $0x3d8] sm:$0xff]
    %v853 = vld [vmem:[#allocation8 + $0x3e0] sm:$0xff]
    %v854 = vld [vmem:[#allocation8 + $0x3e8] sm:$0xff]
    %v855 = vld [vmem:[#allocation8 + $0x3f0] sm:$0xff]
    %v856 = vld [vmem:[#allocation8 + $0x3f8] sm:$0xff]
    %v857 = vld [vmem:[#allocation8 + $0x400] sm:$0xff]
    %v858 = vld [vmem:[#allocation8 + $0x408] sm:$0xff]
    %v859 = vld [vmem:[#allocation8 + $0x410] sm:$0xff]
    %v860 = vld [vmem:[#allocation8 + $0x418] sm:$0xff]
    %v861 = vld [vmem:[#allocation8 + $0x420] sm:$0xff]
    %v862 = vld [vmem:[#allocation8 + $0x428] sm:$0xff]
    %v863 = vld [vmem:[#allocation8 + $0x430] sm:$0xff]
    %v864 = vld [vmem:[#allocation8 + $0x438] sm:$0xff]
    %v865 = vld [vmem:[#allocation8 + $0x440] sm:$0xff]
    %v866 = vld [vmem:[#allocation8 + $0x448] sm:$0xff]
    %v867 = vld [vmem:[#allocation8 + $0x450] sm:$0xff]
    %v868 = vld [vmem:[#allocation8 + $0x458] sm:$0xff]
    %v869 = vld [vmem:[#allocation8 + $0x460] sm:$0xff]
    %v870 = vld [vmem:[#allocation8 + $0x468] sm:$0xff]
    %v871 = vld [vmem:[#allocation8 + $0x470] sm:$0xff]
    %v872 = vld [vmem:[#allocation8 + $0x478] sm:$0xff]
    %v873 = vld [vmem:[#allocation8 + $0x480] sm:$0xff]
    %v874 = vld [vmem:[#allocation8 + $0x488] sm:$0xff]
    %v875 = vld [vmem:[#allocation8 + $0x490] sm:$0xff]
    %v876 = vld [vmem:[#allocation8 + $0x498] sm:$0xff]
    %v877 = vld [vmem:[#allocation8 + $0x4a0] sm:$0xff]
    %v878 = vld [vmem:[#allocation8 + $0x4a8] sm:$0xff]
    %v879 = vld [vmem:[#allocation8 + $0x4b0] sm:$0xff]
    %v880 = vld [vmem:[#allocation8 + $0x4b8] sm:$0xff]
    %v881 = vld [vmem:[#allocation8 + $0x4c0] sm:$0xff]
    %v882 = vld [vmem:[#allocation8 + $0x4c8] sm:$0xff]
    %v883 = vld [vmem:[#allocation8 + $0x4d0] sm:$0xff]
    %v884 = vld [vmem:[#allocation8 + $0x4d8] sm:$0xff]
    %v885 = vld [vmem:[#allocation8 + $0x4e0] sm:$0xff]
    %v886 = vld [vmem:[#allocation8 + $0x4e8] sm:$0xff]
    %v887 = vld [vmem:[#allocation8 + $0x4f0] sm:$0xff]
    %v888 = vld [vmem:[#allocation8 + $0x4f8] sm:$0xff]
    %v889 = vld [vmem:[%s4] sm:$0x3]
    %v891 = vlaneseq
    %v892 = vshrl.u32 %v891, 7
    %v893 = vsub.s32 0, %v892
    %v894 = vrot.slane %v889, %v893
    %v895 = vlaneseq
    %v896 = vshrl.u32 %v895, 7
    %v897 = vsub.s32 1, %v896
    %v898 = vrot.slane %v889, %v897
    %901 = vmatprep.subr.mxu0 %v760
    %902 = vmatpush1.msra.mxu0 %v759
    %903 = vmatprep.subr.mxu0 %v758
    %904 = vmatpush1.msra.mxu0 %v757
    %905 = vmatprep.subr.mxu0 %v756
    %906 = vmatpush1.msra.mxu0 %v755
    %907 = vmatprep.subr.mxu0 %v754
    %908 = vmatpush1.msra.mxu0 %v753
    %909 = vmatprep.subr.mxu0 %v752
    %910 = vmatpush1.msra.mxu0 %v751
    %911 = vmatprep.subr.mxu0 %v750
    %912 = vmatpush1.msra.mxu0 %v749
    %913 = vmatprep.subr.mxu0 %v748
    %914 = vmatpush1.msra.mxu0 %v747
    %915 = vmatprep.subr.mxu0 %v746
    %916 = vmatpush1.msra.mxu0 %v745
    %917 = vmatprep.subr.mxu0 %v744
    %918 = vmatpush1.msra.mxu0 %v743
    %919 = vmatprep.subr.mxu0 %v742
    %920 = vmatpush1.msra.mxu0 %v741
    %921 = vmatprep.subr.mxu0 %v740
    %922 = vmatpush1.msra.mxu0 %v739
    %923 = vmatprep.subr.mxu0 %v738
    %924 = vmatpush1.msra.mxu0 %v737
    %925 = vmatprep.subr.mxu0 %v736
    %926 = vmatpush1.msra.mxu0 %v735
    %927 = vmatprep.subr.mxu0 %v734
    %928 = vmatpush1.msra.mxu0 %v733
    %929 = vmatprep.subr.mxu0 %v732
    %930 = vmatpush1.msra.mxu0 %v731
    %931 = vmatprep.subr.mxu0 %v730
    %932 = vmatpush1.msra.mxu0 %v729
    %933 = vmatprep.subr.mxu0 %v792
    %934 = vmatpush2.msra.mxu0 %v791
    %935 = vmatprep.subr.mxu0 %v790
    %936 = vmatpush2.msra.mxu0 %v789
    %937 = vmatprep.subr.mxu0 %v788
    %938 = vmatpush2.msra.mxu0 %v787
    %939 = vmatprep.subr.mxu0 %v786
    %940 = vmatpush2.msra.mxu0 %v785
    %941 = vmatprep.subr.mxu0 %v784
    %942 = vmatpush2.msra.mxu0 %v783
    %943 = vmatprep.subr.mxu0 %v782
    %944 = vmatpush2.msra.mxu0 %v781
    %945 = vmatprep.subr.mxu0 %v780
    %946 = vmatpush2.msra.mxu0 %v779
    %947 = vmatprep.subr.mxu0 %v778
    %948 = vmatpush2.msra.mxu0 %v777
    %949 = vmatprep.subr.mxu0 %v776
    %950 = vmatpush2.msra.mxu0 %v775
    %951 = vmatprep.subr.mxu0 %v774
    %952 = vmatpush2.msra.mxu0 %v773
    %953 = vmatprep.subr.mxu0 %v772
    %954 = vmatpush2.msra.mxu0 %v771
    %955 = vmatprep.subr.mxu0 %v770
    %956 = vmatpush2.msra.mxu0 %v769
    %957 = vmatprep.subr.mxu0 %v768
    %958 = vmatpush2.msra.mxu0 %v767
    %959 = vmatprep.subr.mxu0 %v766
    %960 = vmatpush2.msra.mxu0 %v765
    %961 = vmatprep.subr.mxu0 %v764
    %962 = vmatpush2.msra.mxu0 %v763
    %963 = vmatprep.subr.mxu0 %v762
    %964 = vmatpush2.msra.mxu0 %v761
    %965 = vmatprep.mubr.f32.mxu0 %v725
    %966 = vmatmul.mubr.f32.gmra.mxu0 %v724
    %v967 = vpop.f32.mrf.mxu0
    %v968 = vadd.f32 %v894, %v967
    %v969 = vpop.f32.mrf.mxu0
    %v970 = vadd.f32 %v898, %v969
    %971 = vdwg.mxu0
    %972 = vmatprep.subr.mxu0 %v824
    %973 = vmatpush1.msra.mxu0 %v823
    %974 = vmatprep.subr.mxu0 %v822
    %975 = vmatpush1.msra.mxu0 %v821
    %976 = vmatprep.subr.mxu0 %v820
    %977 = vmatpush1.msra.mxu0 %v819
    %978 = vmatprep.subr.mxu0 %v818
    %979 = vmatpush1.msra.mxu0 %v817
    %980 = vmatprep.subr.mxu0 %v816
    %981 = vmatpush1.msra.mxu0 %v815
    %982 = vmatprep.subr.mxu0 %v814
    %983 = vmatpush1.msra.mxu0 %v813
    %984 = vmatprep.subr.mxu0 %v812
    %985 = vmatpush1.msra.mxu0 %v811
    %986 = vmatprep.subr.mxu0 %v810
    %987 = vmatpush1.msra.mxu0 %v809
    %988 = vmatprep.subr.mxu0 %v808
    %989 = vmatpush1.msra.mxu0 %v807
    %990 = vmatprep.subr.mxu0 %v806
    %991 = vmatpush1.msra.mxu0 %v805
    %992 = vmatprep.subr.mxu0 %v804
    %993 = vmatpush1.msra.mxu0 %v803
    %994 = vmatprep.subr.mxu0 %v802
    %995 = vmatpush1.msra.mxu0 %v801
    %996 = vmatprep.subr.mxu0 %v800
    %997 = vmatpush1.msra.mxu0 %v799
    %998 = vmatprep.subr.mxu0 %v798
    %999 = vmatpush1.msra.mxu0 %v797
    %1000 = vmatprep.subr.mxu0 %v796
    %1001 = vmatpush1.msra.mxu0 %v795
    %1002 = vmatprep.subr.mxu0 %v794
    %1003 = vmatpush1.msra.mxu0 %v793
    %1004 = vmatprep.subr.mxu0 %v856
    %1005 = vmatpush2.msra.mxu0 %v855
    %1006 = vmatprep.subr.mxu0 %v854
    %1007 = vmatpush2.msra.mxu0 %v853
    %1008 = vmatprep.subr.mxu0 %v852
    %1009 = vmatpush2.msra.mxu0 %v851
    %1010 = vmatprep.subr.mxu0 %v850
    %1011 = vmatpush2.msra.mxu0 %v849
    %1012 = vmatprep.subr.mxu0 %v848
    %1013 = vmatpush2.msra.mxu0 %v847
    %1014 = vmatprep.subr.mxu0 %v846
    %1015 = vmatpush2.msra.mxu0 %v845
    %1016 = vmatprep.subr.mxu0 %v844
    %1017 = vmatpush2.msra.mxu0 %v843
    %1018 = vmatprep.subr.mxu0 %v842
    %1019 = vmatpush2.msra.mxu0 %v841
    %1020 = vmatprep.subr.mxu0 %v840
    %1021 = vmatpush2.msra.mxu0 %v839
    %1022 = vmatprep.subr.mxu0 %v838
    %1023 = vmatpush2.msra.mxu0 %v837
    %1024 = vmatprep.subr.mxu0 %v836
    %1025 = vmatpush2.msra.mxu0 %v835
    %1026 = vmatprep.subr.mxu0 %v834
    %1027 = vmatpush2.msra.mxu0 %v833
    %1028 = vmatprep.subr.mxu0 %v832
    %1029 = vmatpush2.msra.mxu0 %v831
    %1030 = vmatprep.subr.mxu0 %v830
    %1031 = vmatpush2.msra.mxu0 %v829
    %1032 = vmatprep.subr.mxu0 %v828
    %1033 = vmatpush2.msra.mxu0 %v827
    %1034 = vmatprep.subr.mxu0 %v826
    %1035 = vmatpush2.msra.mxu0 %v825
    %1036 = vmatprep.mubr.f32.mxu0 %v727
    %1037 = vmatmul.mubr.f32.gmra.mxu0 %v726
    %v1038 = vpop.f32.mrf.mxu0
    %v1039 = vadd.f32 %v968, %v1038
    %v1040 = vpop.f32.mrf.mxu0
    %v1041 = vadd.f32 %v970, %v1040
    %1042 = vdwg.mxu0
    %1043 = vmatprep.subr.mxu0 %v888
    %1044 = vmatpush1.msra.mxu0 %v887
    %1045 = vmatprep.subr.mxu0 %v886
    %1046 = vmatpush1.msra.mxu0 %v885
    %1047 = vmatprep.subr.mxu0 %v884
    %1048 = vmatpush1.msra.mxu0 %v883
    %1049 = vmatprep.subr.mxu0 %v882
    %1050 = vmatpush1.msra.mxu0 %v881
    %1051 = vmatprep.subr.mxu0 %v880
    %1052 = vmatpush1.msra.mxu0 %v879
    %1053 = vmatprep.subr.mxu0 %v878
    %1054 = vmatpush1.msra.mxu0 %v877
    %1055 = vmatprep.subr.mxu0 %v876
    %1056 = vmatpush1.msra.mxu0 %v875
    %1057 = vmatprep.subr.mxu0 %v874
    %1058 = vmatpush1.msra.mxu0 %v873
    %1059 = vmatprep.subr.mxu0 %v872
    %1060 = vmatpush1.msra.mxu0 %v871
    %1061 = vmatprep.subr.mxu0 %v870
    %1062 = vmatpush1.msra.mxu0 %v869
    %1063 = vmatprep.subr.mxu0 %v868
    %1064 = vmatpush1.msra.mxu0 %v867
    %1065 = vmatprep.subr.mxu0 %v866
    %1066 = vmatpush1.msra.mxu0 %v865
    %1067 = vmatprep.subr.mxu0 %v864
    %1068 = vmatpush1.msra.mxu0 %v863
    %1069 = vmatprep.subr.mxu0 %v862
    %1070 = vmatpush1.msra.mxu0 %v861
    %1071 = vmatprep.subr.mxu0 %v860
    %1072 = vmatpush1.msra.mxu0 %v859
    %1073 = vmatprep.subr.mxu0 %v858
    %1074 = vmatpush1.msra.mxu0 %v857
    %1075 = vmatprep.subr.mxu0 0.0
    %1076 = vmatpush2.msra.mxu0 0.0
    %1077 = vmatprep.subr.mxu0 0.0
    %1078 = vmatpush2.msra.mxu0 0.0
    %1079 = vmatprep.subr.mxu0 0.0
    %1080 = vmatpush2.msra.mxu0 0.0
    %1081 = vmatprep.subr.mxu0 0.0
    %1082 = vmatpush2.msra.mxu0 0.0
    %1083 = vmatprep.subr.mxu0 0.0
    %1084 = vmatpush2.msra.mxu0 0.0
    %1085 = vmatprep.subr.mxu0 0.0
    %1086 = vmatpush2.msra.mxu0 0.0
    %1087 = vmatprep.subr.mxu0 0.0
    %1088 = vmatpush2.msra.mxu0 0.0
    %1089 = vmatprep.subr.mxu0 0.0
    %1090 = vmatpush2.msra.mxu0 0.0
    %1091 = vmatprep.subr.mxu0 0.0
    %1092 = vmatpush2.msra.mxu0 0.0
    %1093 = vmatprep.subr.mxu0 0.0
    %1094 = vmatpush2.msra.mxu0 0.0
    %1095 = vmatprep.subr.mxu0 0.0
    %1096 = vmatpush2.msra.mxu0 0.0
    %1097 = vmatprep.subr.mxu0 0.0
    %1098 = vmatpush2.msra.mxu0 0.0
    %1099 = vmatprep.subr.mxu0 0.0
    %1100 = vmatpush2.msra.mxu0 0.0
    %1101 = vmatprep.subr.mxu0 0.0
    %1102 = vmatpush2.msra.mxu0 0.0
    %1103 = vmatprep.subr.mxu0 0.0
    %1104 = vmatpush2.msra.mxu0 0.0
    %1105 = vmatprep.subr.mxu0 0.0
    %1106 = vmatpush2.msra.mxu0 0.0
    %1107 = vmatprep.mubr.f32.mxu0 0.0
    %1108 = vmatmul.mubr.f32.gmra.mxu0 %v728
    %v1109 = vpop.f32.mrf.mxu0
    %v1110 = vadd.f32 %v1039, %v1109
    %v1111 = vpop.f32.mrf.mxu0
    %v1112 = vadd.f32 %v1041, %v1111
    %1113 = vdwg.mxu0
    %v1114 = vmax.f32 %v1110, 0.0
    %v1115 = vmax.f32 %v1112, 0.0
    %v1116 = vmax.f32 %v1114, %v1115
    %v1117 = vld [vmem:[#allocation10] sm:$0xff]
    %v1118 = vld [vmem:[#allocation10 + $0x8] sm:$0xff]
    %v1119 = vld [vmem:[#allocation10 + $0x10] sm:$0xff]
    %v1120 = vld [vmem:[#allocation10 + $0x18] sm:$0xff]
    %v1121 = vld [vmem:[#allocation10 + $0x20] sm:$0xff]
    %v1122 = vld [vmem:[#allocation10 + $0x28] sm:$0xff]
    %v1123 = vld [vmem:[#allocation10 + $0x30] sm:$0xff]
    %v1124 = vld [vmem:[#allocation10 + $0x38] sm:$0xff]
    %v1125 = vld [vmem:[#allocation10 + $0x40] sm:$0xff]
    %v1126 = vld [vmem:[#allocation10 + $0x48] sm:$0xff]
    %v1127 = vld [vmem:[#allocation10 + $0x50] sm:$0xff]
    %v1128 = vld [vmem:[#allocation10 + $0x58] sm:$0xff]
    %v1129 = vld [vmem:[#allocation10 + $0x60] sm:$0xff]
    %v1130 = vld [vmem:[#allocation10 + $0x68] sm:$0xff]
    %v1131 = vld [vmem:[#allocation10 + $0x70] sm:$0xff]
    %v1132 = vld [vmem:[#allocation10 + $0x78] sm:$0xff]
    %v1133 = vld [vmem:[%s6] sm:$0x1]
    %v1135 = vlaneseq
    %v1136 = vshrl.u32 %v1135, 7
    %v1137 = vsub.s32 0, %v1136
    %v1138 = vrot.slane %v1133, %v1137
    %1140 = vmatprep.subr.mxu0 0.0
    %1141 = vmatpush1.msra.mxu0 %v1132
    %1142 = vmatprep.subr.mxu0 0.0
    %1143 = vmatpush1.msra.mxu0 %v1131
    %1144 = vmatprep.subr.mxu0 0.0
    %1145 = vmatpush1.msra.mxu0 %v1130
    %1146 = vmatprep.subr.mxu0 0.0
    %1147 = vmatpush1.msra.mxu0 %v1129
    %1148 = vmatprep.subr.mxu0 0.0
    %1149 = vmatpush1.msra.mxu0 %v1128
    %1150 = vmatprep.subr.mxu0 0.0
    %1151 = vmatpush1.msra.mxu0 %v1127
    %1152 = vmatprep.subr.mxu0 0.0
    %1153 = vmatpush1.msra.mxu0 %v1126
    %1154 = vmatprep.subr.mxu0 0.0
    %1155 = vmatpush1.msra.mxu0 %v1125
    %1156 = vmatprep.subr.mxu0 0.0
    %1157 = vmatpush1.msra.mxu0 %v1124
    %1158 = vmatprep.subr.mxu0 0.0
    %1159 = vmatpush1.msra.mxu0 %v1123
    %1160 = vmatprep.subr.mxu0 0.0
    %1161 = vmatpush1.msra.mxu0 %v1122
    %1162 = vmatprep.subr.mxu0 0.0
    %1163 = vmatpush1.msra.mxu0 %v1121
    %1164 = vmatprep.subr.mxu0 0.0
    %1165 = vmatpush1.msra.mxu0 %v1120
    %1166 = vmatprep.subr.mxu0 0.0
    %1167 = vmatpush1.msra.mxu0 %v1119
    %1168 = vmatprep.subr.mxu0 0.0
    %1169 = vmatpush1.msra.mxu0 %v1118
    %1170 = vmatprep.subr.mxu0 0.0
    %1171 = vmatpush1.msra.mxu0 %v1117
    %1172 = vmatprep.subr.mxu0 0.0
    %1173 = vmatpush2.msra.mxu0 0.0
    %1174 = vmatprep.subr.mxu0 0.0
    %1175 = vmatpush2.msra.mxu0 0.0
    %1176 = vmatprep.subr.mxu0 0.0
    %1177 = vmatpush2.msra.mxu0 0.0
    %1178 = vmatprep.subr.mxu0 0.0
    %1179 = vmatpush2.msra.mxu0 0.0
    %1180 = vmatprep.subr.mxu0 0.0
    %1181 = vmatpush2.msra.mxu0 0.0
    %1182 = vmatprep.subr.mxu0 0.0
    %1183 = vmatpush2.msra.mxu0 0.0
    %1184 = vmatprep.subr.mxu0 0.0
    %1185 = vmatpush2.msra.mxu0 0.0
    %1186 = vmatprep.subr.mxu0 0.0
    %1187 = vmatpush2.msra.mxu0 0.0
    %1188 = vmatprep.subr.mxu0 0.0
    %1189 = vmatpush2.msra.mxu0 0.0
    %1190 = vmatprep.subr.mxu0 0.0
    %1191 = vmatpush2.msra.mxu0 0.0
    %1192 = vmatprep.subr.mxu0 0.0
    %1193 = vmatpush2.msra.mxu0 0.0
    %1194 = vmatprep.subr.mxu0 0.0
    %1195 = vmatpush2.msra.mxu0 0.0
    %1196 = vmatprep.subr.mxu0 0.0
    %1197 = vmatpush2.msra.mxu0 0.0
    %1198 = vmatprep.subr.mxu0 0.0
    %1199 = vmatpush2.msra.mxu0 0.0
    %1200 = vmatprep.subr.mxu0 0.0
    %1201 = vmatpush2.msra.mxu0 0.0
    %1202 = vmatprep.subr.mxu0 0.0
    %1203 = vmatpush2.msra.mxu0 0.0
    %1204 = vmatprep.mubr.f32.mxu0 0.0
    %1205 = vmatmul.mubr.f32.gmra.mxu0 %v1116
    %v1206 = vpop.f32.mrf.mxu0
    %v1207 = vadd.f32 %v1138, %v1206
    %v1208 = vpop.f32.mrf.mxu0
    %1209 = vdwg.mxu0
    %vm1210 = vcmask 1041408
    %v1211 = vsel %vm1210, %v1207, -inf
    %1212 = vmax.xlane.f32.xlu0 %v1211
    %v1213 = vpop.xlane.xlu0 %1212
    %v1214 = vsub.f32 %v1207, %v1213
    %v1215 = vmul.f32 %v1214, 1.442695
    %v1216 = vpow.pop %v1215
    %v1217 = vsel %vm1210, %v1216, 0.0
    %1218 = vadd.xlane.f32.xlu0 %v1217
    %v1219 = vpop.xlane.xlu0 %1218
    %v1220 = vrcp.pop %v1219
    %v1221 = vmul.f32 %v1216, %v1220
    %1222 = vst [vmem:[#allocation11] sm:$0x3] %v1221
    // Predicated region
    $region50: #{tpu_custom_call.1} parent=1 // pred_check
      _
    $region51: #{tpu_custom_call.1} parent=1 // pred_check_branch
      %1224 = sbr.rel (0) target = $region53
    $region52: #{tpu_custom_call.1} parent=1 // pred_region
      %s1226 = ssub.s32 32, 32
      %1227 = vsyncadd [#allocation4], %s1226
      %s1229 = sshll.u32 [#allocation11], 4
      %s1230 = int_to_ptr.vmem [resolvable:$true] %s1229
      %1232 = dma.vmem_to_hbm [thread:$0]  %s1230, 32, %s7, [#allocation4]
    $region53: #{tpu_custom_call.1} parent=1 // pred_fallthru
      _
    // Predicated region
    $region54: #{tpu_custom_call.1} parent=1 // pred_check
      _
    $region55: #{tpu_custom_call.1} parent=1 // pred_check_branch
      %1234 = sbr.rel (0) target = $region57
    $region56: #{tpu_custom_call.1} parent=1 // pred_region
      %1235 = dma.done [#allocation4], 32
    $region57: #{tpu_custom_call.1} parent=1 // pred_fallthru
      _
    %1236 = vsyncpa [#allocation3], 1
    %1237 = vsyncpa [#allocation6], 1
    %1238 = vsyncpa [#allocation9], 1
    %1239 = vsyncpa [#allocation4], 1

</llo_original>
